<compile_context>
chip_gen: v5e
topology: v5e:2x2
jax: 0.10.0
libtpu: 0.0.40
codegen_flags: <defaults>
</compile_context>

<pallas_src>
import functools

import jax
import jax.numpy as jnp
from jax import lax
from jax.experimental import pallas as pl
from jax.experimental.pallas import tpu as pltpu

_VMEM_LIMIT = 32 * 1024 * 1024     # fits v5e/v6e (128 MiB) and v7x (64 MiB) VMEM
_PAD_SENTINEL = 1e30               # padded query cols -> huge d2, never a kNN hit


def _round_up(x, m):
    return (x + m - 1) // m * m


def _pad_to(n, align, keep_full_below):
    """Pad n to a multiple of `align` unless a single full-extent tile is fine."""
    if n % align == 0 or n <= keep_full_below:
        return n
    return _round_up(n, align)


def _pick_tile(n, candidates):
    for t in candidates:
        if t <= n and n % t == 0:
            return t
    return n


# ---------------------------------------------------------------------------
# Pallas kernel A: negated pairwise squared distances (MXU form).
# ---------------------------------------------------------------------------
def _neg_sqdist_kernel(a_ref, q_ref, out_ref):
    # a_ref[0]: (tm, 8) anchor rows  [-2x, -2y, -2z, 1, |a|^2, 0, 0, 0]
    # q_ref[0]: (8, tn) query cols   [  x,   y,   z, |q|^2, 1, 0, 0, 0]
    # dot = -2 a.q + |q|^2 + |a|^2 = d2 ; negate on the VPU (free slot).
    out_ref[0] = -lax.dot_general(
        a_ref[0], q_ref[0],
        dimension_numbers=(((1,), (0,)), ((), ())),
        preferred_element_type=jnp.float32)


def pairwise_neg_sqdist(anchors_cmaj, queries_cmaj):
    """anchors [B,3,M], queries [B,3,N] (channel-major) -> -d2 [B, M_pad, N_pad].

    Padded query columns get a huge distance (never selected by top_k); padded
    anchor rows are garbage and must be sliced off by the caller."""
    B, _, M = anchors_cmaj.shape
    N = queries_cmaj.shape[2]

    a_nc = jnp.transpose(anchors_cmaj, (0, 2, 1)).astype(jnp.float32)     # [B,M,3]
    a2 = jnp.sum(a_nc * a_nc, axis=-1, keepdims=True)
    a_aug = jnp.concatenate(
        [-2.0 * a_nc, jnp.ones_like(a2), a2,
         jnp.zeros((B, M, 3), jnp.float32)], axis=-1)                     # [B,M,8]

    q = queries_cmaj.astype(jnp.float32)                                  # [B,3,N]
    q2 = jnp.sum(q * q, axis=1, keepdims=True)                            # [B,1,N]

    M_pad = _pad_to(M, 8, keep_full_below=512)
    N_pad = _pad_to(N, 128, keep_full_below=1024)
    if M_pad != M:
        a_aug = jnp.pad(a_aug, ((0, 0), (0, M_pad - M), (0, 0)))
    if N_pad != N:
        q = jnp.pad(q, ((0, 0), (0, 0), (0, N_pad - N)))
        q2 = jnp.pad(q2, ((0, 0), (0, 0), (0, N_pad - N)),
                     constant_values=_PAD_SENTINEL)

    # Queries stay channel-major: (8, tn) RHS blocks are MXU-natural
    # (contraction on sublanes, N lane-dense) -> no in-kernel XLU transpose.
    q_aug = jnp.concatenate(
        [q, q2, jnp.ones((B, 1, N_pad), jnp.float32),
         jnp.zeros((B, 3, N_pad), jnp.float32)], axis=1)                  # [B,8,N_pad]

    tm = _pick_tile(M_pad, (512, 256, 128, 64, 32, 16, 8))
    tn = _pick_tile(N_pad, (1024, 512, 256, 128))

    return pl.pallas_call(
        _neg_sqdist_kernel,
        out_shape=jax.ShapeDtypeStruct((B, M_pad, N_pad), jnp.float32),
        grid=(B, M_pad // tm, N_pad // tn),
        in_specs=[pl.BlockSpec((1, tm, 8), lambda b, i, j: (b, i, 0)),
                  pl.BlockSpec((1, 8, tn), lambda b, i, j: (b, 0, j))],
        out_specs=pl.BlockSpec((1, tm, tn), lambda b, i, j: (b, i, j)),
        compiler_params=pltpu.CompilerParams(
            dimension_semantics=("parallel", "parallel", "parallel"),
            vmem_limit_bytes=_VMEM_LIMIT),
    )(a_aug, q_aug)


# ---------------------------------------------------------------------------
# Pallas kernel B: fused MotionGRU core.
# ---------------------------------------------------------------------------
def _gru_preact_max(grp, h0g, wgrp_ref, wh0_ref):
    """(kt, nt, 4)+(kt, nt, C) neighbor slabs -> (nt, 3C) max-pooled pre-acts."""
    kt, nt, _ = h0g.shape
    pre = (jnp.dot(h0g.reshape(kt * nt, h0g.shape[-1]), wh0_ref[...],
                   preferred_element_type=jnp.float32)
           + jnp.dot(grp.reshape(kt * nt, grp.shape[-1]), wgrp_ref[...],
                     preferred_element_type=jnp.float32))                 # (kt*nt, 3C)
    # Max over neighbors is a leading-dim reduce: elementwise across slabs (VPU).
    return jnp.max(pre.reshape(kt, nt, -1), axis=0)


def _gru_epilogue(acc, feat, wf_ref, bg_ref, w1f_ref, w1h_ref, b1_ref, out_ref):
    c = out_ref.shape[-1]
    # k-invariant feature contribution, hoisted out of the K max:
    #   max_k(g@Wg + feat@Wf + b) = max_k(g@Wg) + feat@Wf + b.
    fc = jnp.dot(feat, wf_ref[...], preferred_element_type=jnp.float32)   # (nt, 2C)
    acc = acc + bg_ref[...]                                               # (nt, 3C)
    r = jax.nn.sigmoid(acc[:, :c] + fc[:, :c])
    z = jax.nn.sigmoid(acc[:, c:2 * c] + fc[:, c:2 * c])
    h10 = acc[:, 2 * c:]
    rh = (r * h10).astype(w1h_ref.dtype)
    h11 = jnp.tanh(
        jnp.dot(feat, w1f_ref[...], preferred_element_type=jnp.float32)
        + jnp.dot(rh, w1h_ref[...], preferred_element_type=jnp.float32)
        + b1_ref[...])
    # TODO(synk): C < 128 keeps this store lane-sparse; secondary vs. g traffic.
    out_ref[0] = (z * h10 + (1.0 - z) * h11).astype(out_ref.dtype)


def _gru_kernel_whole(grp_ref, h0g_ref, feat_ref, wgrp_ref, wh0_ref, wf_ref,
                      bg_ref, w1f_ref, w1h_ref, b1_ref, out_ref):
    acc = _gru_preact_max(grp_ref[0], h0g_ref[0], wgrp_ref, wh0_ref)
    _gru_epilogue(acc, feat_ref[0], wf_ref, bg_ref, w1f_ref, w1h_ref, b1_ref,
                  out_ref)


def _gru_kernel_chunked(grp_ref, h0g_ref, feat_ref, wgrp_ref, wh0_ref, wf_ref,
                        bg_ref, w1f_ref, w1h_ref, b1_ref, out_ref, acc_ref):
    kc = pl.program_id(2)

    @pl.when(kc == 0)
    def _():
        # No ReLU before the max, so the running max starts at -inf.  Zero-padded
        # point rows still yield finite pre-activations, so -inf never reaches
        # the blend (no 0*inf NaN).
        acc_ref[...] = jnp.full_like(acc_ref, -jnp.inf)

    acc_ref[...] = jnp.maximum(
        acc_ref[...],
        _gru_preact_max(grp_ref[0], h0g_ref[0], wgrp_ref, wh0_ref))

    @pl.when(kc == pl.num_programs(2) - 1)
    def _():
        _gru_epilogue(acc_ref[...], feat_ref[0], wf_ref, bg_ref, w1f_ref,
                      w1h_ref, b1_ref, out_ref)


def _pick_gru_tiles(B, N_pad, K, C, Fdim, itemsize, budget):
    """Largest (nt, kt) that fits the VMEM budget; prefer kt == K (drops the
    reduction axis), then the biggest kt*nt (amortizes per-step overhead)."""
    if N_pad % 128 == 0:
        nt_cands = [t for t in (2048, 1024, 512, 256, 128)
                    if t <= N_pad and N_pad % t == 0] or [N_pad]
    else:
        nt_cands = [N_pad]
    k_divs = [d for d in range(K, 0, -1) if K % d == 0]

    def vmem_need(nt, kt):
        g = kt * nt * (4 + C) * itemsize                      # grp + h0 tile
        w = ((4 + C) * 3 * C + Fdim * 3 * C + C * C) * itemsize + 4 * C * 4
        return (2 * g                                         # double-buffered g
                + 2 * nt * Fdim * itemsize                    # feat
                + 2 * nt * C * 4                              # f32 output
                + nt * 3 * C * 4                              # running-max scratch
                + w)

    best, best_key = (nt_cands[-1], 1), None
    for nt in nt_cands:
        for kt in k_divs:
            if vmem_need(nt, kt) <= budget:
                key = (kt == K, kt * nt, kt)
                if best_key is None or key > best_key:
                    best_key, best = key, (nt, kt)
    nt, kt = best
    # v7x megacore: keep >= 2 parallel grid units when another tile size allows.
    if B * (N_pad // nt) < 2:
        for t in nt_cands:
            if t < nt and B * (N_pad // t) >= 2:
                nt = t
                break
    return nt, kt


def gru_fused(grp, nn_H0, feat, Wgrp, Wh0, Wf, bg, W1f, W1h, b1, *,
              vmem_budget=16 * 1024 * 1024):
    """grp [B,K,N,4], nn_H0 [B,K,N,C], feat [B,N,F] (MXU dtype) -> H1 [B,N,C] f32."""
    B, K, N, _ = nn_H0.shape
    C = Wh0.shape[0]
    C3 = 3 * C
    Fdim = feat.shape[-1]
    itemsize = jnp.dtype(nn_H0.dtype).itemsize

    N_pad = _pad_to(N, 128, keep_full_below=1024)
    if N_pad != N:
        grp = jnp.pad(grp, ((0, 0), (0, 0), (0, N_pad - N), (0, 0)))
        nn_H0 = jnp.pad(nn_H0, ((0, 0), (0, 0), (0, N_pad - N), (0, 0)))
        feat = jnp.pad(feat, ((0, 0), (0, N_pad - N), (0, 0)))

    nt, kt = _pick_gru_tiles(B, N_pad, K, C, Fdim, itemsize, vmem_budget)
    n_tiles = N_pad // nt
    k_chunks = K // kt

    out_shape = jax.ShapeDtypeStruct((B, N_pad, C), jnp.float32)
    args = (grp, nn_H0, feat, Wgrp, Wh0, Wf, bg, W1f, W1h, b1)

    if k_chunks == 1:
        # Whole K fits in one tile: no reduction axis, no running-max scratch.
        def cs(shape):
            z = (0,) * len(shape)
            return pl.BlockSpec(shape, lambda b, n: z)

        out = pl.pallas_call(
            _gru_kernel_whole,
            out_shape=out_shape,
            grid=(B, n_tiles),
            in_specs=[
                pl.BlockSpec((1, K, nt, 4), lambda b, n: (b, 0, n, 0)),
                pl.BlockSpec((1, K, nt, C), lambda b, n: (b, 0, n, 0)),
                pl.BlockSpec((1, nt, Fdim), lambda b, n: (b, n, 0)),
                cs((4, C3)), cs((C, C3)), cs((Fdim, 2 * C)), cs((1, C3)),
                cs((Fdim, C)), cs((C, C)), cs((1, C)),
            ],
            out_specs=pl.BlockSpec((1, nt, C), lambda b, n: (b, n, 0)),
            compiler_params=pltpu.CompilerParams(
                dimension_semantics=("parallel", "parallel"),
                vmem_limit_bytes=_VMEM_LIMIT),
        )(*args)
    else:
        def cs(shape):
            z = (0,) * len(shape)
            return pl.BlockSpec(shape, lambda b, n, kc: z)

        out = pl.pallas_call(
            _gru_kernel_chunked,
            out_shape=out_shape,
            grid=(B, n_tiles, k_chunks),
            in_specs=[
                pl.BlockSpec((1, kt, nt, 4), lambda b, n, kc: (b, kc, n, 0)),
                pl.BlockSpec((1, kt, nt, C), lambda b, n, kc: (b, kc, n, 0)),
                pl.BlockSpec((1, nt, Fdim), lambda b, n, kc: (b, n, 0)),
                cs((4, C3)), cs((C, C3)), cs((Fdim, 2 * C)), cs((1, C3)),
                cs((Fdim, C)), cs((C, C)), cs((1, C)),
            ],
            out_specs=pl.BlockSpec((1, nt, C), lambda b, n, kc: (b, n, 0)),
            scratch_shapes=[pltpu.VMEM((nt, C3), jnp.float32)],
            compiler_params=pltpu.CompilerParams(
                dimension_semantics=("parallel", "parallel", "arbitrary"),
                vmem_limit_bytes=_VMEM_LIMIT),
        )(*args)

    return out if N_pad == N else out[:, :N, :]


# ---------------------------------------------------------------------------
# Plain-JAX glue (data-dependent kNN / gathers) + parameter packing
# ---------------------------------------------------------------------------
def _pack_params(params, C, Fdim, mxu_dtype):
    W_R, W_Z, W_H0, W_H1 = (params["W_R"], params["W_Z"], params["W_H0"],
                            params["W_H1"])
    Wgrp = jnp.concatenate([W_R[:4], W_Z[:4], W_H0[:4]], axis=1).astype(mxu_dtype)
    Wh0 = jnp.concatenate([W_R[4:4 + C], W_Z[4:4 + C], W_H0[4:]],
                          axis=1).astype(mxu_dtype)
    Wf = jnp.concatenate([W_R[4 + C:], W_Z[4 + C:]], axis=1).astype(mxu_dtype)
    bg = jnp.concatenate([params["b_R"], params["b_Z"], params["b_H0"]],
                         axis=1).astype(jnp.float32)
    W1f = W_H1[:Fdim].astype(mxu_dtype)
    W1h = W_H1[Fdim:].astype(mxu_dtype)
    b1 = params["b_H1"].astype(jnp.float32)
    return Wgrp, Wh0, Wf, bg, W1f, W1h, b1


def motion_gru_forward(H0, points0, points1, contents1, motions1, params, *, k,
                       mxu_dtype=jnp.bfloat16,
                       gru_vmem_budget=16 * 1024 * 1024):
    """H0 [B,C,N], points* [B,3,N], contents1 [B,C1,N], motions1 [B,C2,N]
       -> H1 [B,C,N].  kNN / distances stay f32; MXU operands use mxu_dtype."""
    B, C, N = H0.shape

    # --- kNN over last-frame points (kernel A emits -d2 directly) -----------
    neg_d2 = pairwise_neg_sqdist(points1, points0)        # [B, M_pad, N_pad] f32
    _, nn_idx = lax.top_k(neg_d2, k)                      # [B, M_pad, k]
    nn_idx = nn_idx[:, :N, :]                             # drop padded anchors
    # TODO(synk): stream a per-anchor top-k inside kernel A (running-best VMEM
    # scratch across N-tiles) to avoid materializing B*N^2 distances at large N.

    # --- grouping / gathers: born in [B, k, N, .] layout and MXU dtype ------
    pts1_nc = jnp.transpose(points1, (0, 2, 1))           # [B,N,3] anchors (cur)
    pts0_nc = jnp.transpose(points0, (0, 2, 1))           # [B,N,3] queries (last)
    idx_t = jnp.transpose(nn_idx, (0, 2, 1))              # [B,k,N] (tiny)
    nn_pts = jax.vmap(lambda p, i: p[i])(pts0_nc, idx_t)  # [B,k,N,3]
    rela = nn_pts - pts1_nc[:, None, :, :]
    dist = jnp.sqrt(jnp.sum(rela * rela, axis=-1, keepdims=True))
    grp = jnp.concatenate([rela, dist], axis=-1).astype(mxu_dtype)   # [B,k,N,4]
    H0_nc = jnp.transpose(H0, (0, 2, 1)).astype(mxu_dtype)           # [B,N,C]
    nn_H0 = jax.vmap(lambda h, i: h[i])(H0_nc, idx_t)                # [B,k,N,C]
    # TODO(synk): fuse this gather into kernel B (scalar-prefetched nn_idx +
    # per-row DMA of H0) to remove the remaining HBM write+read of nn_H0.
    feat = jnp.transpose(jnp.concatenate([contents1, motions1], axis=1),
                         (0, 2, 1)).astype(mxu_dtype)                # [B,N,F]

    Wgrp, Wh0, Wf, bg, W1f, W1h, b1 = _pack_params(params, C, feat.shape[-1],
                                                   mxu_dtype)
    H1_nc = gru_fused(grp, nn_H0, feat, Wgrp, Wh0, Wf, bg, W1f, W1h, b1,
                      vmem_budget=gru_vmem_budget)
    return jnp.transpose(H1_nc, (0, 2, 1))


def reference_forward(H0, points0, points1, contents1, motions1, params, *, k):
    """Pure-JAX reference mirroring the PyTorch module (no Pallas)."""
    features1 = jnp.concatenate([contents1, motions1], axis=1)
    pts1 = jnp.transpose(points1, (0, 2, 1))
    pts0 = jnp.transpose(points0, (0, 2, 1))
    diff = pts1[:, :, None, :] - pts0[:, None, :, :]
    d2 = jnp.sum(diff * diff, axis=-1)
    _, nn_idx = lax.top_k(-d2, k)
    nn_points = jax.vmap(lambda p, i: p[i])(pts0, nn_idx)
    rela = nn_points - pts1[:, :, None, :]
    rela_dist = jnp.sqrt(jnp.sum(rela * rela, axis=-1, keepdims=True))
    nn_group = jnp.concatenate([rela, rela_dist], axis=-1)            # [B,N,k,4]
    H0_nc = jnp.transpose(H0, (0, 2, 1))
    nn_H0 = jax.vmap(lambda h, i: h[i])(H0_nc, nn_idx)                # [B,N,k,C]
    feat_nc = jnp.transpose(features1, (0, 2, 1))                     # [B,N,F]
    feat_exp = jnp.broadcast_to(feat_nc[:, :, None, :],
                                nn_H0.shape[:3] + (feat_nc.shape[-1],))
    x_rz = jnp.concatenate([nn_group, nn_H0, feat_exp], axis=-1)
    x_h0 = jnp.concatenate([nn_group, nn_H0], axis=-1)
    pre_r = jnp.einsum('bnkc,cd->bnkd', x_rz, params["W_R"]) + params["b_R"]
    pre_z = jnp.einsum('bnkc,cd->bnkd', x_rz, params["W_Z"]) + params["b_Z"]
    pre_h = jnp.einsum('bnkc,cd->bnkd', x_h0, params["W_H0"]) + params["b_H0"]
    gate_R = jax.nn.sigmoid(jnp.max(pre_r, axis=2))
    gate_Z = jax.nn.sigmoid(jnp.max(pre_z, axis=2))
    H1_0 = jnp.max(pre_h, axis=2)
    h11_in = jnp.concatenate([feat_nc, gate_R * H1_0], axis=-1)
    H1_1 = jnp.tanh(jnp.einsum('bnc,cd->bnd', h11_in, params["W_H1"])
                    + params["b_H1"])
    H1 = gate_Z * H1_0 + (1.0 - gate_Z) * H1_1
    return jnp.transpose(H1, (0, 2, 1))


def init_params(key, content_size, motion_size, hidden_size):
    """Deterministic synthetic weights for the four 1x1 conv layers."""
    F = content_size + motion_size
    C = hidden_size

    def lin(kk, cin, cout):
        k1, k2 = jax.random.split(kk)
        w = jax.random.normal(k1, (cin, cout), jnp.float32) * 0.1
        b = jax.random.normal(k2, (1, cout), jnp.float32) * 0.1
        return w, b

    keys = jax.random.split(key, 4)
    W_R, b_R = lin(keys[0], 4 + C + F, C)     # cat(nn_group, nn_H0, features1)
    W_Z, b_Z = lin(keys[1], 4 + C + F, C)
    W_H0, b_H0 = lin(keys[2], 4 + C, C)       # cat(nn_group, nn_H0)
    W_H1, b_H1 = lin(keys[3], F + C, C)       # cat(features1, R*H1_0)
    return dict(W_R=W_R, b_R=b_R, W_Z=W_Z, b_Z=b_Z,
                W_H0=W_H0, b_H0=b_H0, W_H1=W_H1, b_H1=b_H1)


if __name__ == "__main__":
    B, N = 2, 16
    k = 4
    content_size, motion_size, hidden_size = 4, 4, 32

    key = jax.random.PRNGKey(0)
    ks = jax.random.split(key, 6)
    H0 = jax.random.normal(ks[0], (B, hidden_size, N), jnp.float32)
    points0 = jax.random.normal(ks[1], (B, 3, N), jnp.float32)
    points1 = jax.random.normal(ks[2], (B, 3, N), jnp.float32)
    contents1 = jax.random.normal(ks[3], (B, content_size, N), jnp.float32)
    motions1 = jax.random.normal(ks[4], (B, motion_size, N), jnp.float32)
    params = init_params(ks[5], content_size, motion_size, hidden_size)

    H1_ref = reference_forward(H0, points0, points1, contents1, motions1,
                               params, k=k)

    # 1) f32 MXU path, whole-K fused kernel (tight check vs reference).
    fwd_f32 = jax.jit(functools.partial(motion_gru_forward, k=k,
                                        mxu_dtype=jnp.float32))
    H1 = fwd_f32(H0, points0, points1, contents1, motions1, params)
    jax.block_until_ready(H1)
    assert H1.shape == (B, hidden_size, N)
    assert jnp.allclose(H1, H1_ref, rtol=2e-3, atol=2e-3), (
        "f32 mismatch, max abs err "
        f"{float(jnp.max(jnp.abs(H1 - H1_ref)))}")

    # 2) default bf16 MXU-operand path (f32 accumulation / gates).
    fwd_bf16 = jax.jit(functools.partial(motion_gru_forward, k=k))
    H1_bf16 = fwd_bf16(H0, points0, points1, contents1, motions1, params)
    jax.block_until_ready(H1_bf16)
    assert H1_bf16.shape == (B, hidden_size, N)
    assert bool(jnp.all(jnp.isfinite(H1_bf16)))
    assert float(jnp.max(jnp.abs(H1_bf16 - H1_ref))) < 0.1

    # 3) chunked-reduction path (tiny VMEM budget forces K chunking + the
    #    -inf running-max scratch); f32 so the check stays tight.
    fwd_chunk = jax.jit(functools.partial(motion_gru_forward, k=k,
                                          mxu_dtype=jnp.float32,
                                          gru_vmem_budget=4096))
    H1_chunk = fwd_chunk(H0, points0, points1, contents1, motions1, params)
    jax.block_until_ready(H1_chunk)
    assert jnp.allclose(H1_chunk, H1_ref, rtol=2e-3, atol=2e-3), (
        "chunked mismatch, max abs err "
        f"{float(jnp.max(jnp.abs(H1_chunk - H1_ref)))}")

    print("KERNEL_OK")
</pallas_src>

<mosaic_0001>
module attributes {stable_mosaic.version = 11 : i64} {
  func.func @_neg_sqdist_kernel(%arg0: i32, %arg1: i32, %arg2: i32, %arg3: memref<1x16x8xf32, #tpu.memory_space<vmem>>, %arg4: memref<1x8x16xf32, #tpu.memory_space<vmem>>, %arg5: memref<1x16x16xf32, #tpu.memory_space<vmem>>) attributes {dimension_semantics = [#tpu.dimension_semantics<parallel>, #tpu.dimension_semantics<parallel>, #tpu.dimension_semantics<parallel>], iteration_bounds = array<i64: 2, 1, 1>, scalar_prefetch = 0 : i64, scratch_operands = 0 : i64, tpu.core_type = #tpu.core_type<tc>, window_params = [{transform_indices = @transform_0, window_bounds = array<i64: 1, 16, 8>}, {transform_indices = @transform_1, window_bounds = array<i64: 1, 8, 16>}, {transform_indices = @transform_2, window_bounds = array<i64: 1, 16, 16>}]} {
    %c0 = arith.constant 0 : index
    %c0_0 = arith.constant 0 : index
    %c0_1 = arith.constant 0 : index
    %0 = vector.load %arg3[%c0, %c0_0, %c0_1] : memref<1x16x8xf32, #tpu.memory_space<vmem>>, vector<1x16x8xf32>
    %1 = vector.shape_cast %0 : vector<1x16x8xf32> to vector<16x8xf32>
    %c0_2 = arith.constant 0 : index
    %c0_3 = arith.constant 0 : index
    %c0_4 = arith.constant 0 : index
    %2 = vector.load %arg4[%c0_2, %c0_3, %c0_4] : memref<1x8x16xf32, #tpu.memory_space<vmem>>, vector<1x8x16xf32>
    %3 = vector.shape_cast %2 : vector<1x8x16xf32> to vector<8x16xf32>
    %cst = arith.constant dense<0.000000e+00> : vector<16x16xf32>
    %4 = tpu.matmul %1, %3, %cst {dimension_numbers = #tpu.dot_dimension_numbers<[1], [0], [0], [1], [0, 0, 1, 1], [], []>} : vector<16x8xf32>, vector<8x16xf32>, vector<16x16xf32> -> vector<16x16xf32>
    %cst_5 = arith.constant 0.000000e+00 : f32
    %5 = vector.broadcast %cst_5 : f32 to vector<16x16xf32>
    %6 = arith.subf %5, %4 : vector<16x16xf32>
    %c0_6 = arith.constant 0 : index
    %c0_7 = arith.constant 0 : index
    %c0_8 = arith.constant 0 : index
    %7 = vector.load %arg5[%c0_6, %c0_7, %c0_8] : memref<1x16x16xf32, #tpu.memory_space<vmem>>, vector<1x16x16xf32>
    %8 = vector.shape_cast %7 : vector<1x16x16xf32> to vector<16x16xf32>
    %9 = vector.shape_cast %6 : vector<16x16xf32> to vector<1x16x16xf32>
    tpu.vector_store %arg5[%c0_6, %c0_7, %c0_8], %9 {strides = array<i32>} : memref<1x16x16xf32, #tpu.memory_space<vmem>>, vector<1x16x16xf32>,
    return
  }
  func.func @transform_0(%arg0: i32, %arg1: i32, %arg2: i32) -> (i32, i32, i32) {
    %c0_i32 = arith.constant 0 : i32
    %c0_i32_0 = arith.constant 0 : i32
    return %arg0, %arg1, %c0_i32 : i32, i32, i32
  }
  func.func @transform_1(%arg0: i32, %arg1: i32, %arg2: i32) -> (i32, i32, i32) {
    %c0_i32 = arith.constant 0 : i32
    %c0_i32_0 = arith.constant 0 : i32
    return %arg0, %c0_i32, %arg2 : i32, i32, i32
  }
  func.func @transform_2(%arg0: i32, %arg1: i32, %arg2: i32) -> (i32, i32, i32) {
    %c0_i32 = arith.constant 0 : i32
    return %arg0, %arg1, %arg2 : i32, i32, i32
  }
}

module attributes {stable_mosaic.version = 11 : i64} {
  func.func @_gru_kernel_whole(%arg0: i32, %arg1: i32, %arg2: memref<1x4x16x4xf32, #tpu.memory_space<vmem>>, %arg3: memref<1x4x16x32xf32, #tpu.memory_space<vmem>>, %arg4: memref<1x16x8xf32, #tpu.memory_space<vmem>>, %arg5: memref<4x96xf32, #tpu.memory_space<vmem>>, %arg6: memref<32x96xf32, #tpu.memory_space<vmem>>, %arg7: memref<8x64xf32, #tpu.memory_space<vmem>>, %arg8: memref<1x96xf32, #tpu.memory_space<vmem>>, %arg9: memref<8x32xf32, #tpu.memory_space<vmem>>, %arg10: memref<32x32xf32, #tpu.memory_space<vmem>>, %arg11: memref<1x32xf32, #tpu.memory_space<vmem>>, %arg12: memref<1x16x32xf32, #tpu.memory_space<vmem>>) attributes {dimension_semantics = [#tpu.dimension_semantics<parallel>, #tpu.dimension_semantics<parallel>], iteration_bounds = array<i64: 2, 1>, scalar_prefetch = 0 : i64, scratch_operands = 0 : i64, tpu.core_type = #tpu.core_type<tc>, window_params = [{transform_indices = @transform_0, window_bounds = array<i64: 1, 4, 16, 4>}, {transform_indices = @transform_1, window_bounds = array<i64: 1, 4, 16, 32>}, {transform_indices = @transform_2, window_bounds = array<i64: 1, 16, 8>}, {pipeline_mode = #tpu.pipeline_mode<synchronous>, transform_indices = @transform_3, window_bounds = array<i64: 4, 96>}, {pipeline_mode = #tpu.pipeline_mode<synchronous>, transform_indices = @transform_4, window_bounds = array<i64: 32, 96>}, {pipeline_mode = #tpu.pipeline_mode<synchronous>, transform_indices = @transform_5, window_bounds = array<i64: 8, 64>}, {pipeline_mode = #tpu.pipeline_mode<synchronous>, transform_indices = @transform_6, window_bounds = array<i64: 1, 96>}, {pipeline_mode = #tpu.pipeline_mode<synchronous>, transform_indices = @transform_7, window_bounds = array<i64: 8, 32>}, {pipeline_mode = #tpu.pipeline_mode<synchronous>, transform_indices = @transform_8, window_bounds = array<i64: 32, 32>}, {pipeline_mode = #tpu.pipeline_mode<synchronous>, transform_indices = @transform_9, window_bounds = array<i64: 1, 32>}, {transform_indices = @transform_10, window_bounds = array<i64: 1, 16, 32>}]} {
    %c0 = arith.constant 0 : index
    %c0_0 = arith.constant 0 : index
    %c0_1 = arith.constant 0 : index
    %c0_2 = arith.constant 0 : index
    %0 = vector.load %arg2[%c0, %c0_0, %c0_1, %c0_2] : memref<1x4x16x4xf32, #tpu.memory_space<vmem>>, vector<1x4x16x4xf32>
    %1 = vector.shape_cast %0 : vector<1x4x16x4xf32> to vector<4x16x4xf32>
    %c0_3 = arith.constant 0 : index
    %c0_4 = arith.constant 0 : index
    %c0_5 = arith.constant 0 : index
    %c0_6 = arith.constant 0 : index
    %2 = vector.load %arg3[%c0_3, %c0_4, %c0_5, %c0_6] : memref<1x4x16x32xf32, #tpu.memory_space<vmem>>, vector<1x4x16x32xf32>
    %3 = vector.shape_cast %2 : vector<1x4x16x32xf32> to vector<4x16x32xf32>
    %4 = vector.shape_cast %3 : vector<4x16x32xf32> to vector<64x32xf32>
    %c0_7 = arith.constant 0 : index
    %c0_8 = arith.constant 0 : index
    %5 = vector.load %arg6[%c0_7, %c0_8] : memref<32x96xf32, #tpu.memory_space<vmem>>, vector<32x96xf32>
    %cst = arith.constant dense<0.000000e+00> : vector<64x96xf32>
    %6 = tpu.matmul %4, %5, %cst {dimension_numbers = #tpu.dot_dimension_numbers<[1], [0], [0], [1], [0, 0, 1, 1], [], []>} : vector<64x32xf32>, vector<32x96xf32>, vector<64x96xf32> -> vector<64x96xf32>
    %7 = vector.shape_cast %1 : vector<4x16x4xf32> to vector<64x4xf32>
    %c0_9 = arith.constant 0 : index
    %c0_10 = arith.constant 0 : index
    %8 = vector.load %arg5[%c0_9, %c0_10] : memref<4x96xf32, #tpu.memory_space<vmem>>, vector<4x96xf32>
    %cst_11 = arith.constant dense<0.000000e+00> : vector<64x96xf32>
    %9 = tpu.matmul %7, %8, %cst_11 {dimension_numbers = #tpu.dot_dimension_numbers<[1], [0], [0], [1], [0, 0, 1, 1], [], []>} : vector<64x4xf32>, vector<4x96xf32>, vector<64x96xf32> -> vector<64x96xf32>
    %10 = arith.addf %6, %9 : vector<64x96xf32>
    %11 = vector.shape_cast %10 : vector<64x96xf32> to vector<4x16x96xf32>
    %cst_12 = arith.constant dense<0xFF800000> : vector<16x96xf32>
    %12 = vector.multi_reduction <maximumf>, %11, %cst_12 [0] : vector<4x16x96xf32> to vector<16x96xf32>
    %c0_13 = arith.constant 0 : index
    %c0_14 = arith.constant 0 : index
    %c0_15 = arith.constant 0 : index
    %13 = vector.load %arg4[%c0_13, %c0_14, %c0_15] : memref<1x16x8xf32, #tpu.memory_space<vmem>>, vector<1x16x8xf32>
    %14 = vector.shape_cast %13 : vector<1x16x8xf32> to vector<16x8xf32>
    %c0_16 = arith.constant 0 : index
    %c0_17 = arith.constant 0 : index
    %15 = vector.load %arg7[%c0_16, %c0_17] : memref<8x64xf32, #tpu.memory_space<vmem>>, vector<8x64xf32>
    %cst_18 = arith.constant dense<0.000000e+00> : vector<16x64xf32>
    %16 = tpu.matmul %14, %15, %cst_18 {dimension_numbers = #tpu.dot_dimension_numbers<[1], [0], [0], [1], [0, 0, 1, 1], [], []>} : vector<16x8xf32>, vector<8x64xf32>, vector<16x64xf32> -> vector<16x64xf32>
    %c0_19 = arith.constant 0 : index
    %c0_20 = arith.constant 0 : index
    %17 = vector.load %arg8[%c0_19, %c0_20] : memref<1x96xf32, #tpu.memory_space<vmem>>, vector<1x96xf32>
    %18 = vector.broadcast %17 : vector<1x96xf32> to vector<16x96xf32>
    %19 = arith.addf %12, %18 : vector<16x96xf32>
    %20 = vector.extract_strided_slice %19 {offsets = [0, 0], sizes = [16, 32], strides = [1, 1]} : vector<16x96xf32> to vector<16x32xf32>
    %21 = vector.extract_strided_slice %16 {offsets = [0, 0], sizes = [16, 32], strides = [1, 1]} : vector<16x64xf32> to vector<16x32xf32>
    %22 = arith.addf %20, %21 : vector<16x32xf32>
    %23 = arith.negf %22 : vector<16x32xf32>
    %24 = math.exp %23 : vector<16x32xf32>
    %cst_21 = arith.constant 1.000000e+00 : f32
    %25 = vector.broadcast %cst_21 : f32 to vector<16x32xf32>
    %26 = arith.addf %25, %24 : vector<16x32xf32>
    %27 = arith.divf %25, %26 : vector<16x32xf32>
    %28 = vector.extract_strided_slice %19 {offsets = [0, 32], sizes = [16, 32], strides = [1, 1]} : vector<16x96xf32> to vector<16x32xf32>
    %29 = vector.extract_strided_slice %16 {offsets = [0, 32], sizes = [16, 32], strides = [1, 1]} : vector<16x64xf32> to vector<16x32xf32>
    %30 = arith.addf %28, %29 : vector<16x32xf32>
    %31 = arith.negf %30 : vector<16x32xf32>
    %32 = math.exp %31 : vector<16x32xf32>
    %cst_22 = arith.constant 1.000000e+00 : f32
    %33 = vector.broadcast %cst_22 : f32 to vector<16x32xf32>
    %34 = arith.addf %33, %32 : vector<16x32xf32>
    %35 = arith.divf %33, %34 : vector<16x32xf32>
    %36 = vector.extract_strided_slice %19 {offsets = [0, 64], sizes = [16, 32], strides = [1, 1]} : vector<16x96xf32> to vector<16x32xf32>
    %37 = arith.mulf %27, %36 : vector<16x32xf32>
    %c0_23 = arith.constant 0 : index
    %c0_24 = arith.constant 0 : index
    %38 = vector.load %arg9[%c0_23, %c0_24] : memref<8x32xf32, #tpu.memory_space<vmem>>, vector<8x32xf32>
    %cst_25 = arith.constant dense<0.000000e+00> : vector<16x32xf32>
    %39 = tpu.matmul %14, %38, %cst_25 {dimension_numbers = #tpu.dot_dimension_numbers<[1], [0], [0], [1], [0, 0, 1, 1], [], []>} : vector<16x8xf32>, vector<8x32xf32>, vector<16x32xf32> -> vector<16x32xf32>
    %c0_26 = arith.constant 0 : index
    %c0_27 = arith.constant 0 : index
    %40 = vector.load %arg10[%c0_26, %c0_27] : memref<32x32xf32, #tpu.memory_space<vmem>>, vector<32x32xf32>
    %cst_28 = arith.constant dense<0.000000e+00> : vector<16x32xf32>
    %41 = tpu.matmul %37, %40, %cst_28 {dimension_numbers = #tpu.dot_dimension_numbers<[1], [0], [0], [1], [0, 0, 1, 1], [], []>} : vector<16x32xf32>, vector<32x32xf32>, vector<16x32xf32> -> vector<16x32xf32>
    %42 = arith.addf %39, %41 : vector<16x32xf32>
    %c0_29 = arith.constant 0 : index
    %c0_30 = arith.constant 0 : index
    %43 = vector.load %arg11[%c0_29, %c0_30] : memref<1x32xf32, #tpu.memory_space<vmem>>, vector<1x32xf32>
    %44 = vector.broadcast %43 : vector<1x32xf32> to vector<16x32xf32>
    %45 = arith.addf %42, %44 : vector<16x32xf32>
    %46 = math.tanh %45 : vector<16x32xf32>
    %47 = arith.mulf %35, %36 : vector<16x32xf32>
    %cst_31 = arith.constant 1.000000e+00 : f32
    %48 = vector.broadcast %cst_31 : f32 to vector<16x32xf32>
    %49 = arith.subf %48, %35 : vector<16x32xf32>
    %50 = arith.mulf %49, %46 : vector<16x32xf32>
    %51 = arith.addf %47, %50 : vector<16x32xf32>
    %c0_32 = arith.constant 0 : index
    %c0_33 = arith.constant 0 : index
    %c0_34 = arith.constant 0 : index
    %52 = vector.load %arg12[%c0_32, %c0_33, %c0_34] : memref<1x16x32xf32, #tpu.memory_space<vmem>>, vector<1x16x32xf32>
    %53 = vector.shape_cast %52 : vector<1x16x32xf32> to vector<16x32xf32>
    %54 = vector.shape_cast %51 : vector<16x32xf32> to vector<1x16x32xf32>
    tpu.vector_store %arg12[%c0_32, %c0_33, %c0_34], %54 {strides = array<i32>} : memref<1x16x32xf32, #tpu.memory_space<vmem>>, vector<1x16x32xf32>,
    return
  }
  func.func @transform_0(%arg0: i32, %arg1: i32) -> (i32, i32, i32, i32) {
    %c0_i32 = arith.constant 0 : i32
    %c0_i32_0 = arith.constant 0 : i32
    %c0_i32_1 = arith.constant 0 : i32
    return %arg0, %c0_i32, %arg1, %c0_i32_0 : i32, i32, i32, i32
  }
  func.func @transform_1(%arg0: i32, %arg1: i32) -> (i32, i32, i32, i32) {
    %c0_i32 = arith.constant 0 : i32
    %c0_i32_0 = arith.constant 0 : i32
    %c0_i32_1 = arith.constant 0 : i32
    return %arg0, %c0_i32, %arg1, %c0_i32_0 : i32, i32, i32, i32
  }
  func.func @transform_2(%arg0: i32, %arg1: i32) -> (i32, i32, i32) {
    %c0_i32 = arith.constant 0 : i32
    %c0_i32_0 = arith.constant 0 : i32
    return %arg0, %arg1, %c0_i32 : i32, i32, i32
  }
  func.func @transform_3(%arg0: i32, %arg1: i32) -> (i32, i32) {
    %c0_i32 = arith.constant 0 : i32
    %c0_i32_0 = arith.constant 0 : i32
    %c0_i32_1 = arith.constant 0 : i32
    return %c0_i32, %c0_i32_0 : i32, i32
  }
  func.func @transform_4(%arg0: i32, %arg1: i32) -> (i32, i32) {
    %c0_i32 = arith.constant 0 : i32
    %c0_i32_0 = arith.constant 0 : i32
    %c0_i32_1 = arith.constant 0 : i32
    return %c0_i32, %c0_i32_0 : i32, i32
  }
  func.func @transform_5(%arg0: i32, %arg1: i32) -> (i32, i32) {
    %c0_i32 = arith.constant 0 : i32
    %c0_i32_0 = arith.constant 0 : i32
    %c0_i32_1 = arith.constant 0 : i32
    return %c0_i32, %c0_i32_0 : i32, i32
  }
  func.func @transform_6(%arg0: i32, %arg1: i32) -> (i32, i32) {
    %c0_i32 = arith.constant 0 : i32
    %c0_i32_0 = arith.constant 0 : i32
    %c0_i32_1 = arith.constant 0 : i32
    return %c0_i32, %c0_i32_0 : i32, i32
  }
  func.func @transform_7(%arg0: i32, %arg1: i32) -> (i32, i32) {
    %c0_i32 = arith.constant 0 : i32
    %c0_i32_0 = arith.constant 0 : i32
    %c0_i32_1 = arith.constant 0 : i32
    return %c0_i32, %c0_i32_0 : i32, i32
  }
  func.func @transform_8(%arg0: i32, %arg1: i32) -> (i32, i32) {
    %c0_i32 = arith.constant 0 : i32
    %c0_i32_0 = arith.constant 0 : i32
    %c0_i32_1 = arith.constant 0 : i32
    return %c0_i32, %c0_i32_0 : i32, i32
  }
  func.func @transform_9(%arg0: i32, %arg1: i32) -> (i32, i32) {
    %c0_i32 = arith.constant 0 : i32
    %c0_i32_0 = arith.constant 0 : i32
    %c0_i32_1 = arith.constant 0 : i32
    return %c0_i32, %c0_i32_0 : i32, i32
  }
  func.func @transform_10(%arg0: i32, %arg1: i32) -> (i32, i32, i32) {
    %c0_i32 = arith.constant 0 : i32
    %c0_i32_0 = arith.constant 0 : i32
    return %arg0, %arg1, %c0_i32 : i32, i32, i32
  }
}

</mosaic_0001>

<llo_original>
// kernel: motion_gru_forward.2
$region0: #{motion_gru_forward.2}
  #allocation0 [shape = 'u32[]', space=smem, size = 0x4, offset = 0x4, fixed_abs, tag = 'smem constant byte address 0x4 - core index']
  #allocation1 [shape = 'u32[72,128]{1,0:T(1,128)}', space=vmem, size = 0x9000, scoped, tag = 'internal scratch']
  %s0 = inlined_call_operand.vmem [shape: f32[2,16,8], index: 0, kind: input, shape index: {}]
  %s1 = inlined_call_operand.vmem [shape: f32[2,8,16], index: 1, kind: input, shape index: {}]
  %s2 = inlined_call_operand.vmem [shape: f32[2,16,16], index: 2, kind: output, shape index: {}]
  %s3 = sld [smem:[#allocation0]]
  $region41: #{motion_gru_forward.2} parent=0
    _
  %s5 = ssub.s32 1, %s3
  %s6 = scalar_select 0, %s5, %s3
  loop: start=0, step=1, limit=4
  $region2: #{motion_gru_forward.2} parent=0 // loop_pre_header
    _
  $region3: #{motion_gru_forward.2} parent=0 // loop_header
    %s8 = sphi 0, %s12
    %p9 = scmp.ge.s32.totalorder %s8, 4
    %s15 = sphi 0, %s34
    %s16 = sphi 0, %s30
    %s17 = sphi 0, %s26
    %s18 = sphi 0, %s15
    %s19 = sphi 0, %s16
    %s20 = sphi 0, %s17
    %s21 = sphi 0, %s18
    %s22 = sphi 0, %s19
    %s23 = sphi 0, %s20
    %s39 = sphi 0, %s41
    %s42 = sphi 0, %s39
    %s43 = sphi 0, %s42
    %s59 = sphi 0, %s43
    %s67 = sphi 0, %s69
    %s70 = sphi 0, %s67
    %s71 = sphi 0, %s70
    %s87 = sphi 0, %s71
    %s97 = sphi 0, %s99
    %s100 = sphi 0, %s97
    %s101 = sphi 0, %s100
    %s117 = sphi 0, %s101
  $region4: #{motion_gru_forward.2} parent=0 // loop_header_branch
    %11 = sbr.rel (%p9) target = $region8
  $region5: #{motion_gru_forward.2} parent=0 // loop_body
    %s13 = ssub.s32 %s8, 1
    %s14 = ssub.s32 %s8, 2
    %s24 = sadd.s32 1, %s17
    %p25 = scmp.ge.s32.totalorder %s24, 1
    %s26 = scalar_select %p25, 0, %s24
    %s27 = sadd.s32 1, %s16
    %s28 = scalar_select %p25, %s27, %s16
    %p29 = scmp.ge.s32.totalorder %s28, 1
    %s30 = scalar_select %p29, 0, %s28
    %s31 = sadd.s32 1, %s15
    %s32 = scalar_select %p29, %s31, %s15
    %p33 = scmp.ge.s32.totalorder %s32, 2
    %s34 = scalar_select %p33, 0, %s32
    %s35 = ssub.s32 %s15, %s34
    %s36 = ssub.s32 %s16, %s30
    %s37 = sor.u32 %s35, %s36
    %p38 = scmp.eq.s32.totalorder %s37, 0
    %s40 = sadd.s32 %s39, 1
    %s41 = scalar_select %p38, %s39, %s40
    %p44 = pneg %p38
    %p45 = scmp.eq.s32.totalorder %s8, 1
    %p46 = por %p44, %p45
    %p47 = scmp.ne.s32.totalorder %s39, %s42
    %p48 = scmp.eq.s32.totalorder %s8, 0
    %p49 = por %p47, %p48
    %p50 = scmp.ne.s32.totalorder %s39, %s42
    %p51 = scmp.eq.s32.totalorder %s13, 1
    %p52 = por %p50, %p51
    %p53 = scmp.ne.s32.totalorder %s42, %s43
    %p54 = scmp.eq.s32.totalorder %s13, 0
    %p55 = por %p53, %p54
    %p56 = scmp.ne.s32.totalorder %s42, %s43
    %p57 = scmp.eq.s32.totalorder %s14, 1
    %p58 = por %p56, %p57
    %p60 = scmp.ne.s32.totalorder %s43, %s59
    %p61 = scmp.eq.s32.totalorder %s14, 0
    %p62 = por %p60, %p61
    %s63 = ssub.s32 %s15, %s34
    %s64 = ssub.s32 %s17, %s26
    %s65 = sor.u32 %s63, %s64
    %p66 = scmp.eq.s32.totalorder %s65, 0
    %s68 = sadd.s32 %s67, 1
    %s69 = scalar_select %p66, %s67, %s68
    %p72 = pneg %p66
    %p73 = scmp.eq.s32.totalorder %s8, 1
    %p74 = por %p72, %p73
    %p75 = scmp.ne.s32.totalorder %s67, %s70
    %p76 = scmp.eq.s32.totalorder %s8, 0
    %p77 = por %p75, %p76
    %p78 = scmp.ne.s32.totalorder %s67, %s70
    %p79 = scmp.eq.s32.totalorder %s13, 1
    %p80 = por %p78, %p79
    %p81 = scmp.ne.s32.totalorder %s70, %s71
    %p82 = scmp.eq.s32.totalorder %s13, 0
    %p83 = por %p81, %p82
    %p84 = scmp.ne.s32.totalorder %s70, %s71
    %p85 = scmp.eq.s32.totalorder %s14, 1
    %p86 = por %p84, %p85
    %p88 = scmp.ne.s32.totalorder %s71, %s87
    %p89 = scmp.eq.s32.totalorder %s14, 0
    %p90 = por %p88, %p89
    %s91 = ssub.s32 %s15, %s34
    %s92 = ssub.s32 %s16, %s30
    %s93 = sor.u32 %s91, %s92
    %s94 = ssub.s32 %s17, %s26
    %s95 = sor.u32 %s93, %s94
    %p96 = scmp.eq.s32.totalorder %s95, 0
    %s98 = sadd.s32 %s97, 1
    %s99 = scalar_select %p96, %s97, %s98
    %p102 = pneg %p96
    %p103 = scmp.eq.s32.totalorder %s8, 1
    %p104 = por %p102, %p103
    %p105 = scmp.ne.s32.totalorder %s97, %s100
    %p106 = scmp.eq.s32.totalorder %s8, 0
    %p107 = por %p105, %p106
    %p108 = scmp.ne.s32.totalorder %s97, %s100
    %p109 = scmp.eq.s32.totalorder %s13, 1
    %p110 = por %p108, %p109
    %p111 = scmp.ne.s32.totalorder %s100, %s101
    %p112 = scmp.eq.s32.totalorder %s13, 0
    %p113 = por %p111, %p112
    %p114 = scmp.ne.s32.totalorder %s100, %s101
    %p115 = scmp.eq.s32.totalorder %s14, 1
    %p116 = por %p114, %p115
    %p118 = scmp.ne.s32.totalorder %s101, %s117
    %p119 = scmp.eq.s32.totalorder %s14, 0
    %p120 = por %p118, %p119
    %p121 = scmp.le.s32.totalorder 1, %s8
    %p122 = scmp.lt.s32.totalorder %s8, 3
    %p123 = pnand %p121, %p122
    %p124 = pneg %p123
    // Predicated region
    $region9: #{motion_gru_forward.2} parent=5 // pred_check
      _
    $region10: #{motion_gru_forward.2} parent=5 // pred_check_branch
      %126 = sbr.rel (%p123) target = $region12
    $region11: #{motion_gru_forward.2} parent=5 // pred_region
      %s127 = ssub.s32 %s8, 1
    $region12: #{motion_gru_forward.2} parent=5 // pred_fallthru
      _
    %p128 = scmp.lt.s32.totalorder %s8, 2
    // Predicated region
    $region13: #{motion_gru_forward.2} parent=5 // pred_check
      %p129 = pneg %p128
    $region14: #{motion_gru_forward.2} parent=5 // pred_check_branch
      %131 = sbr.rel (%p129) target = $region16
    $region15: #{motion_gru_forward.2} parent=5 // pred_region
      // Predicated region
      $region17: #{motion_gru_forward.2} parent=15 // pred_check
        %p132 = pneg %p49
      $region18: #{motion_gru_forward.2} parent=15 // pred_check_branch
        %134 = sbr.rel (%p132) target = $region20
      $region19: #{motion_gru_forward.2} parent=15 // pred_region
        %s135 = smul.u32 2, %s16
        %p136 = scmp.lt.s32.totalorder %s15, 1
        %s137 = scalar_select %p136, %s15, 1
        %p138 = scmp.lt.s32.totalorder %s135, 1
        %s139 = scalar_select %p138, %s135, 1
        %s140 = smul.addr %s137, 2
        %s141 = sadd.s32 %s139, %s140
        %s142 = smul.addr %s141, 8
        %s143 = scalar_lea.vmem %s0, %s142
        %s144 = smul.u32 2, %s16
      $region20: #{motion_gru_forward.2} parent=15 // pred_fallthru
        _
      // Predicated region
      $region21: #{motion_gru_forward.2} parent=15 // pred_check
        %p145 = pneg %p77
      $region22: #{motion_gru_forward.2} parent=15 // pred_check_branch
        %147 = sbr.rel (%p145) target = $region24
      $region23: #{motion_gru_forward.2} parent=15 // pred_region
        %p148 = scmp.lt.s32.totalorder %s15, 1
        %s149 = scalar_select %p148, %s15, 1
        %p150 = scmp.lt.s32.totalorder %s17, 0
        %s151 = scalar_select %p150, %s17, 0
        %s152 = sadd.s32 %s151, %s149
        %s153 = smul.addr %s152, 8
        %s154 = scalar_lea.vmem %s1, %s153
      $region24: #{motion_gru_forward.2} parent=15 // pred_fallthru
        _
    $region16: #{motion_gru_forward.2} parent=5 // pred_fallthru
      _
    %p155 = scmp.le.s32.totalorder 1, %s8
    %p156 = scmp.lt.s32.totalorder %s8, 3
    %p157 = pnand %p155, %p156
    %p158 = pneg %p157
    // Predicated region
    $region25: #{motion_gru_forward.2} parent=5 // pred_check
      _
    $region26: #{motion_gru_forward.2} parent=5 // pred_check_branch
      %160 = sbr.rel (%p157) target = $region28
    $region27: #{motion_gru_forward.2} parent=5 // pred_region
      %s161 = ssub.s32 %s8, 1
      %s162 = smul.u32 2, %s19
      %p163 = scmp.lt.s32.totalorder %s18, 1
      %s164 = scalar_select %p163, %s18, 1
      %p165 = scmp.lt.s32.totalorder %s162, 1
      %s166 = scalar_select %p165, %s162, 1
      %s167 = smul.addr %s164, 2
      %s168 = sadd.s32 %s166, %s167
      %s169 = smul.addr %s168, 8
      %s170 = scalar_lea.vmem %s0, %s169
      %p171 = pneg %p55
      %p172 = pneg %p52
      %p173 = scmp.lt.s32.totalorder %s18, 1
      %s174 = scalar_select %p173, %s18, 1
      %p175 = scmp.lt.s32.totalorder %s20, 0
      %s176 = scalar_select %p175, %s20, 0
      %s177 = sadd.s32 %s176, %s174
      %s178 = smul.addr %s177, 8
      %s179 = scalar_lea.vmem %s1, %s178
      %p180 = pneg %p83
      %p181 = pneg %p80
      %p182 = pneg %p113
      %p183 = pneg %p110
      %s184 = smul.u32 2, %s19
      %p185 = scmp.lt.s32.totalorder %s18, 1
      %s186 = scalar_select %p185, %s18, 1
      %p187 = scmp.lt.s32.totalorder %s184, 1
      %s188 = scalar_select %p187, %s184, 1
      %p189 = scmp.lt.s32.totalorder %s20, 0
      %s190 = scalar_select %p189, %s20, 0
      %s191 = sadd.s32 %s190, %s188
      %s192 = smul.addr %s186, 2
      %s193 = sadd.s32 %s191, %s192
      %s194 = smul.addr %s193, 8
      %s195 = scalar_lea.vmem %s2, %s194
      %s196 = smul.u32 2, %s19
      %p197 = scmp.lt.s32.totalorder %s18, 1
      %s198 = scalar_select %p197, %s18, 1
      %p199 = scmp.lt.s32.totalorder %s196, 1
      %s200 = scalar_select %p199, %s196, 1
      %s201 = smul.addr %s198, 2
      %s202 = sadd.s32 %s200, %s201
      %s203 = smul.addr %s202, 8
      %s204 = scalar_lea.vmem %s0, %s203
      %s205 = smul.u32 2, %s19
      %p206 = scmp.lt.s32.totalorder %s18, 1
      %s207 = scalar_select %p206, %s18, 1
      %p208 = scmp.lt.s32.totalorder %s20, 0
      %s209 = scalar_select %p208, %s20, 0
      %s210 = sadd.s32 %s209, %s207
      %s211 = smul.addr %s210, 8
      %s212 = scalar_lea.vmem %s1, %s211
      %s213 = smul.u32 2, %s19
      %p214 = scmp.lt.s32.totalorder %s18, 1
      %s215 = scalar_select %p214, %s18, 1
      %p216 = scmp.lt.s32.totalorder %s213, 1
      %s217 = scalar_select %p216, %s213, 1
      %p218 = scmp.lt.s32.totalorder %s20, 0
      %s219 = scalar_select %p218, %s20, 0
      %s220 = sadd.s32 %s219, %s217
      %s221 = smul.addr %s215, 2
      %s222 = sadd.s32 %s220, %s221
      %s223 = smul.addr %s222, 8
      %s224 = scalar_lea.vmem %s2, %s223
      %s225 = smul.u32 2, %s19
      %v226 = vld [vmem:[%s204] sm:$0xff]
      %v227 = vld [vmem:[%s204 + $0x8] sm:$0xff]
      %v228 = vld [vmem:[%s212] sm:$0xff]
      %vm229 = vcmask 64512
      %v231 = vsel %vm229, %v226, 0
      %v234 = vsel %vm229, %v227, 0
      %236 = vmatpush.msra.mxu0 0.0
      %237 = vmatpush.msra.mxu0 0.0
      %238 = vmatpush.msra.mxu0 0.0
      %239 = vmatpush.msra.mxu0 0.0
      %240 = vmatpush.msra.mxu0 0.0
      %241 = vmatpush.msra.mxu0 0.0
      %242 = vmatpush.msra.mxu0 0.0
      %243 = vmatpush.msra.mxu0 0.0
      %244 = vmatpush.msra.mxu0 0.0
      %245 = vmatpush.msra.mxu0 0.0
      %246 = vmatpush.msra.mxu0 0.0
      %247 = vmatpush.msra.mxu0 0.0
      %248 = vmatpush.msra.mxu0 0.0
      %249 = vmatpush.msra.mxu0 0.0
      %250 = vmatpush.msra.mxu0 0.0
      %251 = vmatpush.msra.mxu0 %v228
      %252 = vmatmul.f32.gmra.mxu0 %v231
      %v253 = vpop.f32.mrf.mxu0
      %v254 = vadd.f32 0.0, %v253
      %255 = vmatmul.f32.gmra.mxu0 %v234
      %v256 = vpop.f32.mrf.mxu0
      %v257 = vadd.f32 0.0, %v256
      %258 = vdwg.mxu0
      %v259 = vsub.f32 0.0, %v254
      %v260 = vsub.f32 0.0, %v257
      %vm261 = vcmask 130048
      %262 = vst.msk [vmem:[%s224] sm:$0xff] %vm261, %v259
      %263 = vst.msk [vmem:[%s224 + $0x8] sm:$0xff] %vm261, %v260
      %s264 = smul.u32 2, %s19
      %p265 = scmp.lt.s32.totalorder %s18, 1
      %s266 = scalar_select %p265, %s18, 1
      %p267 = scmp.lt.s32.totalorder %s264, 1
      %s268 = scalar_select %p267, %s264, 1
      %p269 = scmp.lt.s32.totalorder %s20, 0
      %s270 = scalar_select %p269, %s20, 0
      %s271 = sadd.s32 %s270, %s268
      %s272 = smul.addr %s266, 2
      %s273 = sadd.s32 %s271, %s272
      %s274 = smul.addr %s273, 8
      %s275 = scalar_lea.vmem %s2, %s274
      // Predicated region
      $region29: #{motion_gru_forward.2} parent=27 // pred_check
        %p276 = pneg %p110
      $region30: #{motion_gru_forward.2} parent=27 // pred_check_branch
        %278 = sbr.rel (%p276) target = $region32
      $region31: #{motion_gru_forward.2} parent=27 // pred_region
        %s279 = smul.u32 2, %s19
      $region32: #{motion_gru_forward.2} parent=27 // pred_fallthru
        _
    $region28: #{motion_gru_forward.2} parent=5 // pred_fallthru
      _
    %p280 = scmp.le.s32.totalorder 2, %s8
    // Predicated region
    $region33: #{motion_gru_forward.2} parent=5 // pred_check
      %p281 = pneg %p280
    $region34: #{motion_gru_forward.2} parent=5 // pred_check_branch
      %283 = sbr.rel (%p281) target = $region36
    $region35: #{motion_gru_forward.2} parent=5 // pred_region
      %s284 = ssub.s32 %s8, 2
      // Predicated region
      $region37: #{motion_gru_forward.2} parent=35 // pred_check
        %p285 = pneg %p116
      $region38: #{motion_gru_forward.2} parent=35 // pred_check_branch
        %287 = sbr.rel (%p285) target = $region40
      $region39: #{motion_gru_forward.2} parent=35 // pred_region
        %s288 = smul.u32 2, %s22
        %p289 = scmp.lt.s32.totalorder %s21, 1
        %s290 = scalar_select %p289, %s21, 1
        %p291 = scmp.lt.s32.totalorder %s288, 1
        %s292 = scalar_select %p291, %s288, 1
        %p293 = scmp.lt.s32.totalorder %s23, 0
        %s294 = scalar_select %p293, %s23, 0
        %s295 = sadd.s32 %s294, %s292
        %s296 = smul.addr %s290, 2
        %s297 = sadd.s32 %s295, %s296
        %s298 = smul.addr %s297, 8
        %s299 = scalar_lea.vmem %s2, %s298
      $region40: #{motion_gru_forward.2} parent=35 // pred_fallthru
        _
    $region36: #{motion_gru_forward.2} parent=5 // pred_fallthru
      _
  $region6: #{motion_gru_forward.2} parent=0 // loop_footer
    %s12 = sadd.s32 1, %s8
  $region7: #{motion_gru_forward.2} parent=0 // loop_footer_branch
    %7 = sbr.rel target = $region3
  $region8: #{motion_gru_forward.2} parent=0 // loop_exit
    _

// kernel: motion_gru_forward.3
$region0: #{motion_gru_forward.3}
  #allocation0 [shape = 'u32[]', space=smem, size = 0x4, offset = 0x4, fixed_abs, tag = 'smem constant byte address 0x4 - core index']
  #allocation1 [shape = 'u32[72,128]{1,0:T(1,128)}', space=vmem, size = 0x9000, scoped, tag = 'internal scratch']
  %s0 = inlined_call_operand.vmem [shape: f32[2,4,16,4], index: 0, kind: input, shape index: {}]
  %s1 = inlined_call_operand.vmem [shape: f32[2,4,16,32], index: 1, kind: input, shape index: {}]
  %s2 = inlined_call_operand.vmem [shape: f32[2,16,8], index: 2, kind: input, shape index: {}]
  %s3 = inlined_call_operand.vmem [shape: f32[4,96], index: 3, kind: input, shape index: {}]
  %s4 = inlined_call_operand.vmem [shape: f32[32,96], index: 4, kind: input, shape index: {}]
  %s5 = inlined_call_operand.vmem [shape: f32[8,64], index: 5, kind: input, shape index: {}]
  %s6 = inlined_call_operand.vmem [shape: f32[1,96], index: 6, kind: input, shape index: {}]
  %s7 = inlined_call_operand.vmem [shape: f32[8,32], index: 7, kind: input, shape index: {}]
  %s8 = inlined_call_operand.vmem [shape: f32[32,32], index: 8, kind: input, shape index: {}]
  %s9 = inlined_call_operand.vmem [shape: f32[1,32], index: 9, kind: input, shape index: {}]
  %s10 = inlined_call_operand.hbm [shape: f32[2,16,32], index: 10, kind: output, shape index: {}]
  %s11 = sld [smem:[#allocation0]]
  $region73: #{motion_gru_forward.3} parent=0
    _
  %s13 = ssub.s32 1, %s11
  %s14 = scalar_select 0, %s13, %s11
  $region1: #{motion_gru_forward.3} parent=0
    #allocation2 [shape = 'u8[16384]{0}', space=vmem, size = 0x4000, scoped, tag = 'output window, operand 0']
    #allocation3 [shape = 's32[2]{0}', space=sflag, size = 0x8, scoped, tag = 'scoped memory for motion_gru_forward.3']
    %15 = vsyncpa [#allocation3], 0
    %s16 = scalar_lea.sflag [#allocation3], 1
    %17 = vsyncpa %s16, 0
    loop: start=0, step=1, limit=4
    $region2: #{motion_gru_forward.3} parent=1 // loop_pre_header
      _
    $region3: #{motion_gru_forward.3} parent=1 // loop_header
      %s19 = sphi 0, %s23
      %p20 = scmp.ge.s32.totalorder %s19, 4
      %s26 = sphi 0, %s38
      %s27 = sphi 0, %s34
      %s28 = sphi 0, %s26
      %s29 = sphi 0, %s27
      %s30 = sphi 0, %s28
      %s31 = sphi 0, %s29
      %s43 = sphi 0, %s45
      %s46 = sphi 0, %s43
      %s47 = sphi 0, %s46
      %s63 = sphi 0, %s47
      %s71 = sphi 0, %s73
      %s74 = sphi 0, %s71
      %s75 = sphi 0, %s74
      %s91 = sphi 0, %s75
      %s99 = sphi 0, %s101
      %s102 = sphi 0, %s99
      %s103 = sphi 0, %s102
      %s119 = sphi 0, %s103
      %s123 = sphi 0, %s123
      %s125 = sphi 0, %s123
      %s126 = sphi 0, %s125
      %s140 = sphi 0, %s126
      %s144 = sphi 0, %s144
      %s146 = sphi 0, %s144
      %s147 = sphi 0, %s146
      %s161 = sphi 0, %s147
      %s165 = sphi 0, %s165
      %s167 = sphi 0, %s165
      %s168 = sphi 0, %s167
      %s182 = sphi 0, %s168
      %s186 = sphi 0, %s186
      %s188 = sphi 0, %s186
      %s189 = sphi 0, %s188
      %s203 = sphi 0, %s189
      %s207 = sphi 0, %s207
      %s209 = sphi 0, %s207
      %s210 = sphi 0, %s209
      %s224 = sphi 0, %s210
      %s228 = sphi 0, %s228
      %s230 = sphi 0, %s228
      %s231 = sphi 0, %s230
      %s245 = sphi 0, %s231
      %s249 = sphi 0, %s249
      %s251 = sphi 0, %s249
      %s252 = sphi 0, %s251
      %s266 = sphi 0, %s252
      %s274 = sphi 0, %s276
      %s277 = sphi 0, %s274
      %s278 = sphi 0, %s277
      %s294 = sphi 0, %s278
    $region4: #{motion_gru_forward.3} parent=1 // loop_header_branch
      %22 = sbr.rel (%p20) target = $region8
    $region5: #{motion_gru_forward.3} parent=1 // loop_body
      %s24 = ssub.s32 %s19, 1
      %s25 = ssub.s32 %s19, 2
      %s32 = sadd.s32 1, %s27
      %p33 = scmp.ge.s32.totalorder %s32, 1
      %s34 = scalar_select %p33, 0, %s32
      %s35 = sadd.s32 1, %s26
      %s36 = scalar_select %p33, %s35, %s26
      %p37 = scmp.ge.s32.totalorder %s36, 2
      %s38 = scalar_select %p37, 0, %s36
      %s39 = ssub.s32 %s26, %s38
      %s40 = ssub.s32 %s27, %s34
      %s41 = sor.u32 %s39, %s40
      %p42 = scmp.eq.s32.totalorder %s41, 0
      %s44 = sadd.s32 %s43, 1
      %s45 = scalar_select %p42, %s43, %s44
      %p48 = pneg %p42
      %p49 = scmp.eq.s32.totalorder %s19, 1
      %p50 = por %p48, %p49
      %p51 = scmp.ne.s32.totalorder %s43, %s46
      %p52 = scmp.eq.s32.totalorder %s19, 0
      %p53 = por %p51, %p52
      %p54 = scmp.ne.s32.totalorder %s43, %s46
      %p55 = scmp.eq.s32.totalorder %s24, 1
      %p56 = por %p54, %p55
      %p57 = scmp.ne.s32.totalorder %s46, %s47
      %p58 = scmp.eq.s32.totalorder %s24, 0
      %p59 = por %p57, %p58
      %p60 = scmp.ne.s32.totalorder %s46, %s47
      %p61 = scmp.eq.s32.totalorder %s25, 1
      %p62 = por %p60, %p61
      %p64 = scmp.ne.s32.totalorder %s47, %s63
      %p65 = scmp.eq.s32.totalorder %s25, 0
      %p66 = por %p64, %p65
      %s67 = ssub.s32 %s26, %s38
      %s68 = ssub.s32 %s27, %s34
      %s69 = sor.u32 %s67, %s68
      %p70 = scmp.eq.s32.totalorder %s69, 0
      %s72 = sadd.s32 %s71, 1
      %s73 = scalar_select %p70, %s71, %s72
      %p76 = pneg %p70
      %p77 = scmp.eq.s32.totalorder %s19, 1
      %p78 = por %p76, %p77
      %p79 = scmp.ne.s32.totalorder %s71, %s74
      %p80 = scmp.eq.s32.totalorder %s19, 0
      %p81 = por %p79, %p80
      %p82 = scmp.ne.s32.totalorder %s71, %s74
      %p83 = scmp.eq.s32.totalorder %s24, 1
      %p84 = por %p82, %p83
      %p85 = scmp.ne.s32.totalorder %s74, %s75
      %p86 = scmp.eq.s32.totalorder %s24, 0
      %p87 = por %p85, %p86
      %p88 = scmp.ne.s32.totalorder %s74, %s75
      %p89 = scmp.eq.s32.totalorder %s25, 1
      %p90 = por %p88, %p89
      %p92 = scmp.ne.s32.totalorder %s75, %s91
      %p93 = scmp.eq.s32.totalorder %s25, 0
      %p94 = por %p92, %p93
      %s95 = ssub.s32 %s26, %s38
      %s96 = ssub.s32 %s27, %s34
      %s97 = sor.u32 %s95, %s96
      %p98 = scmp.eq.s32.totalorder %s97, 0
      %s100 = sadd.s32 %s99, 1
      %s101 = scalar_select %p98, %s99, %s100
      %p104 = pneg %p98
      %p105 = scmp.eq.s32.totalorder %s19, 1
      %p106 = por %p104, %p105
      %p107 = scmp.ne.s32.totalorder %s99, %s102
      %p108 = scmp.eq.s32.totalorder %s19, 0
      %p109 = por %p107, %p108
      %p110 = scmp.ne.s32.totalorder %s99, %s102
      %p111 = scmp.eq.s32.totalorder %s24, 1
      %p112 = por %p110, %p111
      %p113 = scmp.ne.s32.totalorder %s102, %s103
      %p114 = scmp.eq.s32.totalorder %s24, 0
      %p115 = por %p113, %p114
      %p116 = scmp.ne.s32.totalorder %s102, %s103
      %p117 = scmp.eq.s32.totalorder %s25, 1
      %p118 = por %p116, %p117
      %p120 = scmp.ne.s32.totalorder %s103, %s119
      %p121 = scmp.eq.s32.totalorder %s25, 0
      %p122 = por %p120, %p121
      %s124 = sadd.s32 %s123, 1
      %p127 = scmp.eq.s32.totalorder %s19, 1
      %p128 = scmp.ne.s32.totalorder %s123, %s125
      %p129 = scmp.eq.s32.totalorder %s19, 0
      %p130 = por %p128, %p129
      %p131 = scmp.ne.s32.totalorder %s123, %s125
      %p132 = scmp.eq.s32.totalorder %s24, 1
      %p133 = por %p131, %p132
      %p134 = scmp.ne.s32.totalorder %s125, %s126
      %p135 = scmp.eq.s32.totalorder %s24, 0
      %p136 = por %p134, %p135
      %p137 = scmp.ne.s32.totalorder %s125, %s126
      %p138 = scmp.eq.s32.totalorder %s25, 1
      %p139 = por %p137, %p138
      %p141 = scmp.ne.s32.totalorder %s126, %s140
      %p142 = scmp.eq.s32.totalorder %s25, 0
      %p143 = por %p141, %p142
      %s145 = sadd.s32 %s144, 1
      %p148 = scmp.eq.s32.totalorder %s19, 1
      %p149 = scmp.ne.s32.totalorder %s144, %s146
      %p150 = scmp.eq.s32.totalorder %s19, 0
      %p151 = por %p149, %p150
      %p152 = scmp.ne.s32.totalorder %s144, %s146
      %p153 = scmp.eq.s32.totalorder %s24, 1
      %p154 = por %p152, %p153
      %p155 = scmp.ne.s32.totalorder %s146, %s147
      %p156 = scmp.eq.s32.totalorder %s24, 0
      %p157 = por %p155, %p156
      %p158 = scmp.ne.s32.totalorder %s146, %s147
      %p159 = scmp.eq.s32.totalorder %s25, 1
      %p160 = por %p158, %p159
      %p162 = scmp.ne.s32.totalorder %s147, %s161
      %p163 = scmp.eq.s32.totalorder %s25, 0
      %p164 = por %p162, %p163
      %s166 = sadd.s32 %s165, 1
      %p169 = scmp.eq.s32.totalorder %s19, 1
      %p170 = scmp.ne.s32.totalorder %s165, %s167
      %p171 = scmp.eq.s32.totalorder %s19, 0
      %p172 = por %p170, %p171
      %p173 = scmp.ne.s32.totalorder %s165, %s167
      %p174 = scmp.eq.s32.totalorder %s24, 1
      %p175 = por %p173, %p174
      %p176 = scmp.ne.s32.totalorder %s167, %s168
      %p177 = scmp.eq.s32.totalorder %s24, 0
      %p178 = por %p176, %p177
      %p179 = scmp.ne.s32.totalorder %s167, %s168
      %p180 = scmp.eq.s32.totalorder %s25, 1
      %p181 = por %p179, %p180
      %p183 = scmp.ne.s32.totalorder %s168, %s182
      %p184 = scmp.eq.s32.totalorder %s25, 0
      %p185 = por %p183, %p184
      %s187 = sadd.s32 %s186, 1
      %p190 = scmp.eq.s32.totalorder %s19, 1
      %p191 = scmp.ne.s32.totalorder %s186, %s188
      %p192 = scmp.eq.s32.totalorder %s19, 0
      %p193 = por %p191, %p192
      %p194 = scmp.ne.s32.totalorder %s186, %s188
      %p195 = scmp.eq.s32.totalorder %s24, 1
      %p196 = por %p194, %p195
      %p197 = scmp.ne.s32.totalorder %s188, %s189
      %p198 = scmp.eq.s32.totalorder %s24, 0
      %p199 = por %p197, %p198
      %p200 = scmp.ne.s32.totalorder %s188, %s189
      %p201 = scmp.eq.s32.totalorder %s25, 1
      %p202 = por %p200, %p201
      %p204 = scmp.ne.s32.totalorder %s189, %s203
      %p205 = scmp.eq.s32.totalorder %s25, 0
      %p206 = por %p204, %p205
      %s208 = sadd.s32 %s207, 1
      %p211 = scmp.eq.s32.totalorder %s19, 1
      %p212 = scmp.ne.s32.totalorder %s207, %s209
      %p213 = scmp.eq.s32.totalorder %s19, 0
      %p214 = por %p212, %p213
      %p215 = scmp.ne.s32.totalorder %s207, %s209
      %p216 = scmp.eq.s32.totalorder %s24, 1
      %p217 = por %p215, %p216
      %p218 = scmp.ne.s32.totalorder %s209, %s210
      %p219 = scmp.eq.s32.totalorder %s24, 0
      %p220 = por %p218, %p219
      %p221 = scmp.ne.s32.totalorder %s209, %s210
      %p222 = scmp.eq.s32.totalorder %s25, 1
      %p223 = por %p221, %p222
      %p225 = scmp.ne.s32.totalorder %s210, %s224
      %p226 = scmp.eq.s32.totalorder %s25, 0
      %p227 = por %p225, %p226
      %s229 = sadd.s32 %s228, 1
      %p232 = scmp.eq.s32.totalorder %s19, 1
      %p233 = scmp.ne.s32.totalorder %s228, %s230
      %p234 = scmp.eq.s32.totalorder %s19, 0
      %p235 = por %p233, %p234
      %p236 = scmp.ne.s32.totalorder %s228, %s230
      %p237 = scmp.eq.s32.totalorder %s24, 1
      %p238 = por %p236, %p237
      %p239 = scmp.ne.s32.totalorder %s230, %s231
      %p240 = scmp.eq.s32.totalorder %s24, 0
      %p241 = por %p239, %p240
      %p242 = scmp.ne.s32.totalorder %s230, %s231
      %p243 = scmp.eq.s32.totalorder %s25, 1
      %p244 = por %p242, %p243
      %p246 = scmp.ne.s32.totalorder %s231, %s245
      %p247 = scmp.eq.s32.totalorder %s25, 0
      %p248 = por %p246, %p247
      %s250 = sadd.s32 %s249, 1
      %p253 = scmp.eq.s32.totalorder %s19, 1
      %p254 = scmp.ne.s32.totalorder %s249, %s251
      %p255 = scmp.eq.s32.totalorder %s19, 0
      %p256 = por %p254, %p255
      %p257 = scmp.ne.s32.totalorder %s249, %s251
      %p258 = scmp.eq.s32.totalorder %s24, 1
      %p259 = por %p257, %p258
      %p260 = scmp.ne.s32.totalorder %s251, %s252
      %p261 = scmp.eq.s32.totalorder %s24, 0
      %p262 = por %p260, %p261
      %p263 = scmp.ne.s32.totalorder %s251, %s252
      %p264 = scmp.eq.s32.totalorder %s25, 1
      %p265 = por %p263, %p264
      %p267 = scmp.ne.s32.totalorder %s252, %s266
      %p268 = scmp.eq.s32.totalorder %s25, 0
      %p269 = por %p267, %p268
      %s270 = ssub.s32 %s26, %s38
      %s271 = ssub.s32 %s27, %s34
      %s272 = sor.u32 %s270, %s271
      %p273 = scmp.eq.s32.totalorder %s272, 0
      %s275 = sadd.s32 %s274, 1
      %s276 = scalar_select %p273, %s274, %s275
      %p279 = pneg %p273
      %p280 = scmp.eq.s32.totalorder %s19, 1
      %p281 = por %p279, %p280
      %p282 = scmp.ne.s32.totalorder %s274, %s277
      %p283 = scmp.eq.s32.totalorder %s19, 0
      %p284 = por %p282, %p283
      %p285 = scmp.ne.s32.totalorder %s274, %s277
      %p286 = scmp.eq.s32.totalorder %s24, 1
      %p287 = por %p285, %p286
      %p288 = scmp.ne.s32.totalorder %s277, %s278
      %p289 = scmp.eq.s32.totalorder %s24, 0
      %p290 = por %p288, %p289
      %p291 = scmp.ne.s32.totalorder %s277, %s278
      %p292 = scmp.eq.s32.totalorder %s25, 1
      %p293 = por %p291, %p292
      %p295 = scmp.ne.s32.totalorder %s278, %s294
      %p296 = scmp.eq.s32.totalorder %s25, 0
      %p297 = por %p295, %p296
      %p298 = scmp.le.s32.totalorder 1, %s19
      %p299 = scmp.lt.s32.totalorder %s19, 3
      %p300 = pnand %p298, %p299
      %p301 = pneg %p300
      // Predicated region
      $region9: #{motion_gru_forward.3} parent=5 // pred_check
        _
      $region10: #{motion_gru_forward.3} parent=5 // pred_check_branch
        %303 = sbr.rel (%p300) target = $region12
      $region11: #{motion_gru_forward.3} parent=5 // pred_region
        %s304 = ssub.s32 %s19, 1
        // Predicated region
        $region13: #{motion_gru_forward.3} parent=11 // pred_check
          %p305 = pneg %p136
        $region14: #{motion_gru_forward.3} parent=11 // pred_check_branch
          %307 = sbr.rel (%p305) target = $region16
        $region15: #{motion_gru_forward.3} parent=11 // pred_region
          _
        $region16: #{motion_gru_forward.3} parent=11 // pred_fallthru
          _
        // Predicated region
        $region17: #{motion_gru_forward.3} parent=11 // pred_check
          %p308 = pneg %p157
        $region18: #{motion_gru_forward.3} parent=11 // pred_check_branch
          %310 = sbr.rel (%p308) target = $region20
        $region19: #{motion_gru_forward.3} parent=11 // pred_region
          _
        $region20: #{motion_gru_forward.3} parent=11 // pred_fallthru
          _
        // Predicated region
        $region21: #{motion_gru_forward.3} parent=11 // pred_check
          %p311 = pneg %p178
        $region22: #{motion_gru_forward.3} parent=11 // pred_check_branch
          %313 = sbr.rel (%p311) target = $region24
        $region23: #{motion_gru_forward.3} parent=11 // pred_region
          _
        $region24: #{motion_gru_forward.3} parent=11 // pred_fallthru
          _
        // Predicated region
        $region25: #{motion_gru_forward.3} parent=11 // pred_check
          %p314 = pneg %p199
        $region26: #{motion_gru_forward.3} parent=11 // pred_check_branch
          %316 = sbr.rel (%p314) target = $region28
        $region27: #{motion_gru_forward.3} parent=11 // pred_region
          _
        $region28: #{motion_gru_forward.3} parent=11 // pred_fallthru
          _
        // Predicated region
        $region29: #{motion_gru_forward.3} parent=11 // pred_check
          %p317 = pneg %p220
        $region30: #{motion_gru_forward.3} parent=11 // pred_check_branch
          %319 = sbr.rel (%p317) target = $region32
        $region31: #{motion_gru_forward.3} parent=11 // pred_region
          _
        $region32: #{motion_gru_forward.3} parent=11 // pred_fallthru
          _
        // Predicated region
        $region33: #{motion_gru_forward.3} parent=11 // pred_check
          %p320 = pneg %p241
        $region34: #{motion_gru_forward.3} parent=11 // pred_check_branch
          %322 = sbr.rel (%p320) target = $region36
        $region35: #{motion_gru_forward.3} parent=11 // pred_region
          _
        $region36: #{motion_gru_forward.3} parent=11 // pred_fallthru
          _
        // Predicated region
        $region37: #{motion_gru_forward.3} parent=11 // pred_check
          %p323 = pneg %p262
        $region38: #{motion_gru_forward.3} parent=11 // pred_check_branch
          %325 = sbr.rel (%p323) target = $region40
        $region39: #{motion_gru_forward.3} parent=11 // pred_region
          _
        $region40: #{motion_gru_forward.3} parent=11 // pred_fallthru
          _
      $region12: #{motion_gru_forward.3} parent=5 // pred_fallthru
        _
      %p326 = scmp.lt.s32.totalorder %s19, 2
      // Predicated region
      $region41: #{motion_gru_forward.3} parent=5 // pred_check
        %p327 = pneg %p326
      $region42: #{motion_gru_forward.3} parent=5 // pred_check_branch
        %329 = sbr.rel (%p327) target = $region44
      $region43: #{motion_gru_forward.3} parent=5 // pred_region
        // Predicated region
        $region45: #{motion_gru_forward.3} parent=43 // pred_check
          %p330 = pneg %p53
        $region46: #{motion_gru_forward.3} parent=43 // pred_check_branch
          %332 = sbr.rel (%p330) target = $region48
        $region47: #{motion_gru_forward.3} parent=43 // pred_region
          %s333 = smul.u32 2, %s27
          %p334 = scmp.lt.s32.totalorder %s26, 1
          %s335 = scalar_select %p334, %s26, 1
          %p336 = scmp.lt.s32.totalorder %s333, 1
          %s337 = scalar_select %p336, %s333, 1
          %s338 = smul.addr %s335, 8
          %s339 = sadd.s32 %s337, %s338
          %s340 = smul.addr %s339, 8
          %s341 = scalar_lea.vmem %s0, %s340
          %s342 = smul.u32 2, %s27
        $region48: #{motion_gru_forward.3} parent=43 // pred_fallthru
          _
        // Predicated region
        $region49: #{motion_gru_forward.3} parent=43 // pred_check
          %p343 = pneg %p81
        $region50: #{motion_gru_forward.3} parent=43 // pred_check_branch
          %345 = sbr.rel (%p343) target = $region52
        $region51: #{motion_gru_forward.3} parent=43 // pred_region
          %s346 = smul.u32 2, %s27
          %p347 = scmp.lt.s32.totalorder %s26, 1
          %s348 = scalar_select %p347, %s26, 1
          %p349 = scmp.lt.s32.totalorder %s346, 1
          %s350 = scalar_select %p349, %s346, 1
          %s351 = smul.addr %s348, 8
          %s352 = sadd.s32 %s350, %s351
          %s353 = smul.addr %s352, 8
          %s354 = scalar_lea.vmem %s1, %s353
          %s355 = smul.u32 2, %s27
        $region52: #{motion_gru_forward.3} parent=43 // pred_fallthru
          _
        // Predicated region
        $region53: #{motion_gru_forward.3} parent=43 // pred_check
          %p356 = pneg %p109
        $region54: #{motion_gru_forward.3} parent=43 // pred_check_branch
          %358 = sbr.rel (%p356) target = $region56
        $region55: #{motion_gru_forward.3} parent=43 // pred_region
          %s359 = smul.u32 2, %s27
          %p360 = scmp.lt.s32.totalorder %s26, 1
          %s361 = scalar_select %p360, %s26, 1
          %p362 = scmp.lt.s32.totalorder %s359, 1
          %s363 = scalar_select %p362, %s359, 1
          %s364 = smul.addr %s361, 2
          %s365 = sadd.s32 %s363, %s364
          %s366 = smul.addr %s365, 8
          %s367 = scalar_lea.vmem %s2, %s366
          %s368 = smul.u32 2, %s27
        $region56: #{motion_gru_forward.3} parent=43 // pred_fallthru
          _
      $region44: #{motion_gru_forward.3} parent=5 // pred_fallthru
        _
      %p369 = scmp.le.s32.totalorder 1, %s19
      %p370 = scmp.lt.s32.totalorder %s19, 3
      %p371 = pnand %p369, %p370
      %p372 = pneg %p371
      // Predicated region
      $region57: #{motion_gru_forward.3} parent=5 // pred_check
        _
      $region58: #{motion_gru_forward.3} parent=5 // pred_check_branch
        %374 = sbr.rel (%p371) target = $region60
      $region59: #{motion_gru_forward.3} parent=5 // pred_region
        %s375 = ssub.s32 %s19, 1
        %s376 = smul.u32 2, %s29
        %p377 = scmp.lt.s32.totalorder %s28, 1
        %s378 = scalar_select %p377, %s28, 1
        %p379 = scmp.lt.s32.totalorder %s376, 1
        %s380 = scalar_select %p379, %s376, 1
        %s381 = smul.addr %s378, 8
        %s382 = sadd.s32 %s380, %s381
        %s383 = smul.addr %s382, 8
        %s384 = scalar_lea.vmem %s0, %s383
        %p385 = pneg %p59
        %p386 = pneg %p56
        %s387 = smul.u32 2, %s29
        %p388 = scmp.lt.s32.totalorder %s28, 1
        %s389 = scalar_select %p388, %s28, 1
        %p390 = scmp.lt.s32.totalorder %s387, 1
        %s391 = scalar_select %p390, %s387, 1
        %s392 = smul.addr %s389, 8
        %s393 = sadd.s32 %s391, %s392
        %s394 = smul.addr %s393, 8
        %s395 = scalar_lea.vmem %s1, %s394
        %p396 = pneg %p87
        %p397 = pneg %p84
        %s398 = smul.u32 2, %s29
        %p399 = scmp.lt.s32.totalorder %s28, 1
        %s400 = scalar_select %p399, %s28, 1
        %p401 = scmp.lt.s32.totalorder %s398, 1
        %s402 = scalar_select %p401, %s398, 1
        %s403 = smul.addr %s400, 2
        %s404 = sadd.s32 %s402, %s403
        %s405 = smul.addr %s404, 8
        %s406 = scalar_lea.vmem %s2, %s405
        %p407 = pneg %p115
        %p408 = pneg %p112
        %p409 = pneg %p136
        %p410 = pneg %p133
        %p411 = pneg %p157
        %p412 = pneg %p154
        %p413 = pneg %p178
        %p414 = pneg %p175
        %p415 = pneg %p199
        %p416 = pneg %p196
        %p417 = pneg %p220
        %p418 = pneg %p217
        %p419 = pneg %p241
        %p420 = pneg %p238
        %p421 = pneg %p262
        %p422 = pneg %p259
        %p423 = pneg %p290
        %p424 = pneg %p287
        %s425 = sand.u32 %s277, 1
        %s426 = scalar_lea.sflag [#allocation3], %s425
        %s427 = sand.u32 %s277, 1
        %s428 = smul.addr %s427, 16
        %s429 = scalar_lea.vmem [#allocation2], %s428
        %s430 = smul.u32 2, %s29
        %p431 = scmp.lt.s32.totalorder %s28, 1
        %s432 = scalar_select %p431, %s28, 1
        %p433 = scmp.lt.s32.totalorder %s430, 1
        %s434 = scalar_select %p433, %s430, 1
        %s435 = smul.addr %s432, 8
        %s436 = sadd.s32 %s434, %s435
        %s437 = smul.addr %s436, 8
        %s438 = scalar_lea.vmem %s0, %s437
        %s439 = smul.u32 2, %s29
        %s440 = smul.u32 2, %s29
        %p441 = scmp.lt.s32.totalorder %s28, 1
        %s442 = scalar_select %p441, %s28, 1
        %p443 = scmp.lt.s32.totalorder %s440, 1
        %s444 = scalar_select %p443, %s440, 1
        %s445 = smul.addr %s442, 8
        %s446 = sadd.s32 %s444, %s445
        %s447 = smul.addr %s446, 8
        %s448 = scalar_lea.vmem %s1, %s447
        %s449 = smul.u32 2, %s29
        %s450 = smul.u32 2, %s29
        %p451 = scmp.lt.s32.totalorder %s28, 1
        %s452 = scalar_select %p451, %s28, 1
        %p453 = scmp.lt.s32.totalorder %s450, 1
        %s454 = scalar_select %p453, %s450, 1
        %s455 = smul.addr %s452, 2
        %s456 = sadd.s32 %s454, %s455
        %s457 = smul.addr %s456, 8
        %s458 = scalar_lea.vmem %s2, %s457
        %s459 = smul.u32 2, %s29
        %s460 = smul.u32 2, %s29
        %v461 = vld [vmem:[%s438] sm:$0xff]
        %v462 = vld [vmem:[%s438 + $0x8] sm:$0xff]
        %v463 = vld [vmem:[%s438 + $0x10] sm:$0xff]
        %v464 = vld [vmem:[%s438 + $0x18] sm:$0xff]
        %v465 = vld [vmem:[%s438 + $0x20] sm:$0xff]
        %v466 = vld [vmem:[%s438 + $0x28] sm:$0xff]
        %v467 = vld [vmem:[%s438 + $0x30] sm:$0xff]
        %v468 = vld [vmem:[%s438 + $0x38] sm:$0xff]
        %v469 = vld [vmem:[%s448] sm:$0xff]
        %v470 = vld [vmem:[%s448 + $0x8] sm:$0xff]
        %v471 = vld [vmem:[%s448 + $0x10] sm:$0xff]
        %v472 = vld [vmem:[%s448 + $0x18] sm:$0xff]
        %v473 = vld [vmem:[%s448 + $0x20] sm:$0xff]
        %v474 = vld [vmem:[%s448 + $0x28] sm:$0xff]
        %v475 = vld [vmem:[%s448 + $0x30] sm:$0xff]
        %v476 = vld [vmem:[%s448 + $0x38] sm:$0xff]
        %v477 = vld [vmem:[%s4] sm:$0xff]
        %v478 = vld [vmem:[%s4 + $0x8] sm:$0xff]
        %v479 = vld [vmem:[%s4 + $0x10] sm:$0xff]
        %v480 = vld [vmem:[%s4 + $0x18] sm:$0xff]
        %v481 = vld [vmem:[%s3] sm:$0xf]
        %vm482 = vcmask 31744
        %v484 = vsel %vm482, %v461, 0
        %v487 = vsel %vm482, %v462, 0
        %v490 = vsel %vm482, %v463, 0
        %v493 = vsel %vm482, %v464, 0
        %v496 = vsel %vm482, %v465, 0
        %v499 = vsel %vm482, %v466, 0
        %v502 = vsel %vm482, %v467, 0
        %v505 = vsel %vm482, %v468, 0
        %vm507 = vcmask 1043456
        %v509 = vsel %vm507, %v481, 0
        %511 = vmatpush.msra.mxu0 0.0
        %512 = vmatpush.msra.mxu0 0.0
        %513 = vmatpush.msra.mxu0 0.0
        %514 = vmatpush.msra.mxu0 0.0
        %515 = vmatpush.msra.mxu0 0.0
        %516 = vmatpush.msra.mxu0 0.0
        %517 = vmatpush.msra.mxu0 0.0
        %518 = vmatpush.msra.mxu0 0.0
        %519 = vmatpush.msra.mxu0 0.0
        %520 = vmatpush.msra.mxu0 0.0
        %521 = vmatpush.msra.mxu0 0.0
        %522 = vmatpush.msra.mxu0 0.0
        %523 = vmatpush.msra.mxu0 0.0
        %524 = vmatpush.msra.mxu0 0.0
        %525 = vmatpush.msra.mxu0 0.0
        %526 = vmatpush.msra.mxu0 %v509
        %527 = vmatmul.f32.gmra.mxu0 %v484
        %v528 = vpop.f32.mrf.mxu0
        %v529 = vadd.f32 0.0, %v528
        %530 = vmatmul.f32.gmra.mxu0 %v487
        %v531 = vpop.f32.mrf.mxu0
        %v532 = vadd.f32 0.0, %v531
        %533 = vmatmul.f32.gmra.mxu0 %v490
        %v534 = vpop.f32.mrf.mxu0
        %v535 = vadd.f32 0.0, %v534
        %536 = vmatmul.f32.gmra.mxu0 %v493
        %v537 = vpop.f32.mrf.mxu0
        %v538 = vadd.f32 0.0, %v537
        %539 = vmatmul.f32.gmra.mxu0 %v496
        %v540 = vpop.f32.mrf.mxu0
        %v541 = vadd.f32 0.0, %v540
        %542 = vmatmul.f32.gmra.mxu0 %v499
        %v543 = vpop.f32.mrf.mxu0
        %v544 = vadd.f32 0.0, %v543
        %545 = vmatmul.f32.gmra.mxu0 %v502
        %v546 = vpop.f32.mrf.mxu0
        %v547 = vadd.f32 0.0, %v546
        %548 = vmatmul.f32.gmra.mxu0 %v505
        %v549 = vpop.f32.mrf.mxu0
        %v550 = vadd.f32 0.0, %v549
        %551 = vdwg.mxu0
        %vm552 = vcmask 261120
        %v554 = vsel %vm552, %v469, 0
        %v557 = vsel %vm552, %v470, 0
        %v560 = vsel %vm552, %v471, 0
        %v563 = vsel %vm552, %v472, 0
        %v566 = vsel %vm552, %v473, 0
        %v569 = vsel %vm552, %v474, 0
        %v572 = vsel %vm552, %v475, 0
        %v575 = vsel %vm552, %v476, 0
        %577 = vmatpush.msra.mxu0 0.0
        %578 = vmatpush.msra.mxu0 0.0
        %579 = vmatpush.msra.mxu0 0.0
        %580 = vmatpush.msra.mxu0 0.0
        %581 = vmatpush.msra.mxu0 0.0
        %582 = vmatpush.msra.mxu0 0.0
        %583 = vmatpush.msra.mxu0 0.0
        %584 = vmatpush.msra.mxu0 0.0
        %585 = vmatpush.msra.mxu0 0.0
        %586 = vmatpush.msra.mxu0 0.0
        %587 = vmatpush.msra.mxu0 0.0
        %588 = vmatpush.msra.mxu0 0.0
        %589 = vmatpush.msra.mxu0 %v480
        %590 = vmatpush.msra.mxu0 %v479
        %591 = vmatpush.msra.mxu0 %v478
        %592 = vmatpush.msra.mxu0 %v477
        %593 = vmatmul.f32.gmra.mxu0 %v554
        %v594 = vpop.f32.mrf.mxu0
        %v595 = vadd.f32 %v529, %v594
        %596 = vmatmul.f32.gmra.mxu0 %v557
        %v597 = vpop.f32.mrf.mxu0
        %v598 = vadd.f32 %v532, %v597
        %599 = vmatmul.f32.gmra.mxu0 %v560
        %v600 = vpop.f32.mrf.mxu0
        %v601 = vadd.f32 %v535, %v600
        %602 = vmatmul.f32.gmra.mxu0 %v563
        %v603 = vpop.f32.mrf.mxu0
        %v604 = vadd.f32 %v538, %v603
        %605 = vmatmul.f32.gmra.mxu0 %v566
        %v606 = vpop.f32.mrf.mxu0
        %v607 = vadd.f32 %v541, %v606
        %608 = vmatmul.f32.gmra.mxu0 %v569
        %v609 = vpop.f32.mrf.mxu0
        %v610 = vadd.f32 %v544, %v609
        %611 = vmatmul.f32.gmra.mxu0 %v572
        %v612 = vpop.f32.mrf.mxu0
        %v613 = vadd.f32 %v547, %v612
        %614 = vmatmul.f32.gmra.mxu0 %v575
        %v615 = vpop.f32.mrf.mxu0
        %v616 = vadd.f32 %v550, %v615
        %617 = vdwg.mxu0
        %vm618 = vcmask 785408
        %v619 = vsel %vm618, %v595, -inf
        %v620 = vsel %vm618, %v601, -inf
        %v621 = vsel %vm618, %v607, -inf
        %v622 = vmax.f32 %v619, %v621
        %v623 = vsel %vm618, %v613, -inf
        %v624 = vmax.f32 %v620, %v623
        %v625 = vmax.f32 %v622, %v624
        %v626 = vsel %vm618, %v598, -inf
        %v627 = vsel %vm618, %v604, -inf
        %v628 = vsel %vm618, %v610, -inf
        %v629 = vmax.f32 %v626, %v628
        %v630 = vsel %vm618, %v616, -inf
        %v631 = vmax.f32 %v627, %v630
        %v632 = vmax.f32 %v629, %v631
        %v633 = vld [vmem:[%s458] sm:$0xff]
        %v634 = vld [vmem:[%s458 + $0x8] sm:$0xff]
        %v635 = vld [vmem:[%s5] sm:$0xff]
        %vm636 = vcmask 64512
        %v638 = vsel %vm636, %v633, 0
        %v641 = vsel %vm636, %v634, 0
        %643 = vmatpush.msra.mxu0 0.0
        %644 = vmatpush.msra.mxu0 0.0
        %645 = vmatpush.msra.mxu0 0.0
        %646 = vmatpush.msra.mxu0 0.0
        %647 = vmatpush.msra.mxu0 0.0
        %648 = vmatpush.msra.mxu0 0.0
        %649 = vmatpush.msra.mxu0 0.0
        %650 = vmatpush.msra.mxu0 0.0
        %651 = vmatpush.msra.mxu0 0.0
        %652 = vmatpush.msra.mxu0 0.0
        %653 = vmatpush.msra.mxu0 0.0
        %654 = vmatpush.msra.mxu0 0.0
        %655 = vmatpush.msra.mxu0 0.0
        %656 = vmatpush.msra.mxu0 0.0
        %657 = vmatpush.msra.mxu0 0.0
        %658 = vmatpush.msra.mxu0 %v635
        %659 = vmatmul.f32.gmra.mxu0 %v638
        %v660 = vpop.f32.mrf.mxu0
        %v661 = vadd.f32 0.0, %v660
        %662 = vmatmul.f32.gmra.mxu0 %v641
        %v663 = vpop.f32.mrf.mxu0
        %v664 = vadd.f32 0.0, %v663
        %665 = vdwg.mxu0
        %v666 = vld [vmem:[%s6] sm:$0x1]
        %v668 = vperm.slane %v666, 0
        %v670 = vadd.f32 %v625, %v668
        %v671 = vadd.f32 %v632, %v668
        %v672 = vadd.f32 %v670, %v661
        %v673 = vadd.f32 %v671, %v664
        %v674 = vxor.u32 %v672, 2147483648
        %v675 = vxor.u32 %v673, 2147483648
        %v676 = vmul.f32 %v674, 1.442695
        %v677 = vpow.pop %v676
        %v678 = vmul.f32 %v675, 1.442695
        %v679 = vpow.pop %v678
        %v680 = vadd.f32 %v677, 1.0
        %v681 = vadd.f32 %v679, 1.0
        %v682 = vrcp.pop %v680
        %v683 = vmul.f32 %v680, %v682
        %v684 = vsub.f32 1.0, %v683
        %v685 = vmul.f32 %v682, %v684
        %v686 = vadd.f32 %v682, %v685
        %vm687 = vweird.f32 %v680
        %vm688 = vweird.f32 %v682
        %vm689 = vmor %vm687, %vm688
        %v690 = vsel %vm689, %v682, %v686
        %v691 = vand.u32 2147483647, %v680
        %vm692 = vcmp.eq.f32.partialorder %v691, 8.507059e+37
        %v693 = vand.u32 %v680, 2147483648
        %v694 = vor.u32 1.1754944e-38, %v693
        %v695 = vsel %vm692, %v694, %v690
        %v696 = vmul.f32 1.0, %v695
        %v697 = vrcp.pop %v681
        %v698 = vmul.f32 %v681, %v697
        %v699 = vsub.f32 1.0, %v698
        %v700 = vmul.f32 %v697, %v699
        %v701 = vadd.f32 %v697, %v700
        %vm702 = vweird.f32 %v681
        %vm703 = vweird.f32 %v697
        %vm704 = vmor %vm702, %vm703
        %v705 = vsel %vm704, %v697, %v701
        %v706 = vand.u32 2147483647, %v681
        %vm707 = vcmp.eq.f32.partialorder %v706, 8.507059e+37
        %v708 = vand.u32 %v681, 2147483648
        %v709 = vor.u32 1.1754944e-38, %v708
        %v710 = vsel %vm707, %v709, %v705
        %v711 = vmul.f32 1.0, %v710
        %714 = vrot.lane.b32.xlu0 %v670, 64
        %v715 = vpop.permute.xlu0 %714
        %716 = vrot.lane.b32.xlu0 %v671, 64
        %v717 = vpop.permute.xlu0 %716
        %v720 = vmul.f32 %v696, %v715
        %v721 = vmul.f32 %v711, %v717
        %v722 = vld [vmem:[%s7] sm:$0xff]
        %v723 = vld [vmem:[%s8] sm:$0xff]
        %v724 = vld [vmem:[%s8 + $0x8] sm:$0xff]
        %v725 = vld [vmem:[%s8 + $0x10] sm:$0xff]
        %v726 = vld [vmem:[%s8 + $0x18] sm:$0xff]
        %v728 = vsel %vm552, %v720, 0
        %v731 = vsel %vm552, %v721, 0
        %733 = vmatpush.msra.mxu0 0.0
        %734 = vmatpush.msra.mxu0 0.0
        %735 = vmatpush.msra.mxu0 0.0
        %736 = vmatpush.msra.mxu0 0.0
        %737 = vmatpush.msra.mxu0 0.0
        %738 = vmatpush.msra.mxu0 0.0
        %739 = vmatpush.msra.mxu0 0.0
        %740 = vmatpush.msra.mxu0 0.0
        %741 = vmatpush.msra.mxu0 0.0
        %742 = vmatpush.msra.mxu0 0.0
        %743 = vmatpush.msra.mxu0 0.0
        %744 = vmatpush.msra.mxu0 0.0
        %745 = vmatpush.msra.mxu0 %v726
        %746 = vmatpush.msra.mxu0 %v725
        %747 = vmatpush.msra.mxu0 %v724
        %748 = vmatpush.msra.mxu0 %v723
        %749 = vmatmul.f32.gmra.mxu0 %v728
        %v750 = vpop.f32.mrf.mxu0
        %v751 = vadd.f32 0.0, %v750
        %752 = vmatmul.f32.gmra.mxu0 %v731
        %v753 = vpop.f32.mrf.mxu0
        %v754 = vadd.f32 0.0, %v753
        %755 = vdwg.mxu0
        %756 = vmatpush.msra.mxu0 0.0
        %757 = vmatpush.msra.mxu0 0.0
        %758 = vmatpush.msra.mxu0 0.0
        %759 = vmatpush.msra.mxu0 0.0
        %760 = vmatpush.msra.mxu0 0.0
        %761 = vmatpush.msra.mxu0 0.0
        %762 = vmatpush.msra.mxu0 0.0
        %763 = vmatpush.msra.mxu0 0.0
        %764 = vmatpush.msra.mxu0 0.0
        %765 = vmatpush.msra.mxu0 0.0
        %766 = vmatpush.msra.mxu0 0.0
        %767 = vmatpush.msra.mxu0 0.0
        %768 = vmatpush.msra.mxu0 0.0
        %769 = vmatpush.msra.mxu0 0.0
        %770 = vmatpush.msra.mxu0 0.0
        %771 = vmatpush.msra.mxu0 %v722
        %772 = vmatmul.f32.gmra.mxu0 %v638
        %v773 = vpop.f32.mrf.mxu0
        %v774 = vadd.f32 %v751, %v773
        %775 = vmatmul.f32.gmra.mxu0 %v641
        %v776 = vpop.f32.mrf.mxu0
        %v777 = vadd.f32 %v754, %v776
        %778 = vdwg.mxu0
        %v779 = vld [vmem:[%s9] sm:$0x1]
        %v781 = vperm.slane %v779, 0
        %v783 = vadd.f32 %v774, %v781
        %v784 = vadd.f32 %v777, %v781
        %v785 = vtanh.pop %v783
        %v786 = vtanh.pop %v784
        %787 = vrot.lane.b32.xlu0 %v670, 96
        %v788 = vpop.permute.xlu0 %787
        %789 = vrot.lane.b32.xlu0 %v671, 96
        %v790 = vpop.permute.xlu0 %789
        %v793 = vmul.f32 %v696, %v788
        %v794 = vmul.f32 %v711, %v790
        %v795 = vsub.f32 1.0, %v696
        %v796 = vsub.f32 1.0, %v711
        %799 = vrot.lane.b32.xlu0 %v785, 32
        %v800 = vpop.permute.xlu0 %799
        %801 = vrot.lane.b32.xlu0 %v786, 32
        %v802 = vpop.permute.xlu0 %801
        %v805 = vmul.f32 %v795, %v800
        %v806 = vmul.f32 %v796, %v802
        %v807 = vadd.f32 %v793, %v805
        %v808 = vadd.f32 %v794, %v806
        %811 = vrot.lane.b32.xlu0 %v807, 96
        %v812 = vpop.permute.xlu0 %811
        %813 = vrot.lane.b32.xlu0 %v808, 96
        %v814 = vpop.permute.xlu0 %813
        %817 = vst.msk [vmem:[%s429] sm:$0xff] %vm552, %v812
        %818 = vst.msk [vmem:[%s429 + $0x8] sm:$0xff] %vm552, %v814
        %s819 = sand.u32 %s277, 1
        %s820 = scalar_lea.sflag [#allocation3], %s819
        %s821 = sand.u32 %s277, 1
        %s822 = smul.addr %s821, 16
        %s823 = scalar_lea.vmem [#allocation2], %s822
        // Predicated region
        $region61: #{motion_gru_forward.3} parent=59 // pred_check
          %p824 = pneg %p287
        $region62: #{motion_gru_forward.3} parent=59 // pred_check_branch
          %826 = sbr.rel (%p824) target = $region64
        $region63: #{motion_gru_forward.3} parent=59 // pred_region
          %s827 = smul.u32 2, %s29
          %829 = vsyncadd %s820, 0
          %s830 = smul.addr %s28, 2
          %s831 = sadd.s32 %s827, %s830
          %s832 = smul.addr %s831, 8
          %s833 = scalar_lea.hbm %s10, %s832
          %s834 = sshll.u32 %s823, 4
          %s835 = int_to_ptr.vmem [resolvable:$true] %s834
          %s836 = sshll.u32 %s833, 4
          %s837 = int_to_ptr.hbm [resolvable:$true] %s836
          %842 = dma.vmem_to_hbm [thread:$0]  %s835, 256, %s837, %s820, 128, 128, 8
        $region64: #{motion_gru_forward.3} parent=59 // pred_fallthru
          _
      $region60: #{motion_gru_forward.3} parent=5 // pred_fallthru
        _
      %p843 = scmp.le.s32.totalorder 2, %s19
      // Predicated region
      $region65: #{motion_gru_forward.3} parent=5 // pred_check
        %p844 = pneg %p843
      $region66: #{motion_gru_forward.3} parent=5 // pred_check_branch
        %846 = sbr.rel (%p844) target = $region68
      $region67: #{motion_gru_forward.3} parent=5 // pred_region
        %s847 = ssub.s32 %s19, 2
        // Predicated region
        $region69: #{motion_gru_forward.3} parent=67 // pred_check
          %p848 = pneg %p293
        $region70: #{motion_gru_forward.3} parent=67 // pred_check_branch
          %850 = sbr.rel (%p848) target = $region72
        $region71: #{motion_gru_forward.3} parent=67 // pred_region
          %s851 = sand.u32 %s278, 1
          %s852 = scalar_lea.sflag [#allocation3], %s851
          %s853 = sand.u32 %s278, 1
          %s854 = smul.addr %s853, 16
          %s855 = scalar_lea.vmem [#allocation2], %s854
          %857 = dma.done %s852, 256
        $region72: #{motion_gru_forward.3} parent=67 // pred_fallthru
          _
      $region68: #{motion_gru_forward.3} parent=5 // pred_fallthru
        _
    $region6: #{motion_gru_forward.3} parent=1 // loop_footer
      %s23 = sadd.s32 1, %s19
    $region7: #{motion_gru_forward.3} parent=1 // loop_footer_branch
      %18 = sbr.rel target = $region3
    $region8: #{motion_gru_forward.3} parent=1 // loop_exit
      _
    %858 = vsyncpa [#allocation3], 1
    %s859 = scalar_lea.sflag [#allocation3], 1
    %860 = vsyncpa %s859, 1

</llo_original>
